<compile_context>
chip_gen: v5e
topology: v5e:2x2
jax: 0.10.0
libtpu: 0.0.40
codegen_flags: <defaults>
</compile_context>

<pallas_src>
import functools

import jax
import jax.numpy as jnp
from jax.experimental import pallas as pl
from jax.experimental.pallas import tpu as pltpu


def _attn_pool_kernel(x_ref, pos0_ref, possp_ref, wq_ref, bq_ref, wk_ref,
                      bk_ref, wv_ref, bv_ref, wc_ref, bc_ref, hsel_ref,
                      hexp_ref, out_ref, *, num_heads, scale, hw_valid):
    f32 = jnp.float32
    x = x_ref[...]                                   # (BB, HWp, E) compute dtype
    bb, hwp, e = x.shape
    cdt = x.dtype

    # ---- token construction (class token handled separately; no concat).
    # Mean over the *valid* spatial tokens, accumulated in f32 (padded tokens
    # are zero, so the sum is unaffected).
    t0_f32 = jnp.sum(x.astype(f32), axis=1) * (1.0 / hw_valid) + pos0_ref[...]
    t0 = t0_f32.astype(cdt)                                          # (BB, E)
    x_sp = (x + possp_ref[...][None, :, :]).reshape(bb * hwp, e)     # (BB*HWp, E)

    wq = wq_ref[...]
    wk = wk_ref[...]
    wv = wv_ref[...]

    # ---- projections: big-M MXU matmuls, compute-dtype operands, f32 acc ----
    q = (jnp.dot(t0, wq, preferred_element_type=f32) + bq_ref[...]) * scale  # (BB, E)
    k0 = jnp.dot(t0, wk, preferred_element_type=f32) + bk_ref[...]           # (BB, E)
    v0 = jnp.dot(t0, wv, preferred_element_type=f32) + bv_ref[...]           # (BB, E)
    k_sp = (jnp.dot(x_sp, wk, preferred_element_type=f32)
            + bk_ref[...]).astype(cdt)                                       # (BB*HWp, E)
    v_sp = (jnp.dot(x_sp, wv, preferred_element_type=f32)
            + bv_ref[...]).astype(cdt)                                       # (BB*HWp, E)

    # ---- per-head scores via one-hot head-selector matmul (no head loop, no
    #      transposes); operands in compute dtype, accumulation in f32 ----
    hsel = hsel_ref[...]                                                     # (E, H)
    q_c = q.astype(cdt)
    prod_sp = (k_sp.reshape(bb, hwp, e) * q_c[:, None, :]).reshape(bb * hwp, e)
    s_sp = jnp.dot(prod_sp, hsel,
                   preferred_element_type=f32).reshape(bb, hwp, num_heads)   # (BB, HWp, H)
    s0 = jnp.dot((k0 * q).astype(cdt), hsel, preferred_element_type=f32)     # (BB, H)

    # ---- mask padded keys, then softmax over the HW+1 valid keys (f32) ----
    if hwp != hw_valid:
        valid = jax.lax.broadcasted_iota(jnp.int32, (1, hwp, num_heads), 1) < hw_valid
        s_sp = jnp.where(valid, s_sp, -1e30)
    m = jnp.maximum(jnp.max(s_sp, axis=1), s0)                               # (BB, H)
    e_sp = jnp.exp(s_sp - m[:, None, :])                                     # (BB, HWp, H)
    e0 = jnp.exp(s0 - m)                                                     # (BB, H)
    inv = pl.reciprocal(e0 + jnp.sum(e_sp, axis=1), approx=False)            # (BB, H)

    # ---- value weighting: expand head weights back to E lanes with the
    #      transposed selector (compute-dtype operands), reduce over keys in f32 ----
    hexp = hexp_ref[...]                                                     # (H, E)
    w_sp = jnp.dot((e_sp * inv[:, None, :]).astype(cdt).reshape(bb * hwp, num_heads),
                   hexp, preferred_element_type=f32).reshape(bb, hwp, e)     # (BB, HWp, E)
    w0 = jnp.dot((e0 * inv).astype(cdt), hexp, preferred_element_type=f32)   # (BB, E)
    attn = w0 * v0 + jnp.sum(w_sp * v_sp.reshape(bb, hwp, e), axis=1)        # (BB, E) f32

    # ---- output projection ----
    out = (jnp.dot(attn.astype(cdt), wc_ref[...], preferred_element_type=f32)
           + bc_ref[...])                                                    # (BB, O)
    out_ref[...] = out.astype(out_ref.dtype)


def _supports_single_buffering():
    """Probe pipeline_mode=pl.Buffered(1) support (narrow TypeError catch)."""
    if not hasattr(pl, "Buffered"):
        return False
    try:
        pl.BlockSpec((1, 1), lambda i: (0, 0), pipeline_mode=pl.Buffered(1))
        return True
    except TypeError:
        return False


def _vmem_capacity_bytes():
    """Generation-aware physical VMEM per core; conservative fallback (v7x)."""
    try:
        return int(pltpu.get_tpu_info().vmem_capacity_bytes)
    except Exception:
        return 64 << 20


def _auto_batch_target(hwp, e, o, num_heads, cdt, vmem_cap):
    """Batch-block target that keeps the per-step working set inside VMEM."""
    isz = jnp.dtype(cdt).itemsize
    resident = (3 * e * e + e * o + hwp * e + 2 * e * num_heads) * isz + (4 * e + o) * 4
    budget = max(vmem_cap - 2 * resident, vmem_cap // 8)
    per_batch = hwp * (e * (7 * isz + 10) + 12 * num_heads) + 8 * o + 32 * e
    return int(max(8, min(64, budget // max(per_batch, 1))))


def _pick_batch_block(n, target):
    """Largest multiple-of-8 divisor of n that is <= target and <= n//2 (so the
    'parallel' batch grid has >= 2 steps for the second v7x TensorCore).  Falls
    back to the whole batch, which keeps the 2-D output BlockSpec legal."""
    cap = n // 2 if n >= 2 else n
    target = max(1, min(int(target), cap))
    best = 0
    for bb in range(8, target + 1, 8):
        if n % bb == 0:
            best = bb
    return best if best else n


def _vmem_limit_bytes(bb, hwp, e, o, num_heads, cdt, out_dtype, single_buffer,
                      vmem_cap):
    isz = jnp.dtype(cdt).itemsize
    osz = jnp.dtype(out_dtype).itemsize
    resident = ((3 * e * e + e * o + hwp * e + 2 * e * num_heads) * isz
                + (4 * e + o) * 4)                        # weights/pos/selectors + f32 biases
    if not single_buffer:
        resident *= 2                                     # constants double-buffered
    streamed = 2 * (bb * hwp * e * isz + bb * o * osz)    # double-buffered x / out blocks
    scratch = bb * hwp * (e * (5 * isz + 6) + 12 * num_heads) + 64 * bb * e
    est = int(1.5 * (resident + streamed + scratch))
    return int(min(max(est, 32 << 20), vmem_cap - (2 << 20)))


def attention_pool_2d(x_nchw, params, num_heads, *, compute_dtype=None,
                      batch_block=None):
    n, c, h, w = x_nchw.shape
    hw = h * w
    e = c
    o = params["c_w"].shape[0]
    assert e % num_heads == 0, "embed_dim must be divisible by num_heads"
    hd = e // num_heads
    # bf16 MXU operands by default (f32 accumulation); jnp.float32 is the debug path.
    cdt = (jnp.dtype(compute_dtype) if compute_dtype is not None
           else jnp.dtype(jnp.bfloat16))
    out_dtype = x_nchw.dtype

    hwp = ((hw + 7) // 8) * 8                 # pad spatial tokens to sublane multiple
    vmem_cap = _vmem_capacity_bytes()
    if batch_block is None:
        batch_block = _auto_batch_target(hwp, e, o, num_heads, cdt, vmem_cap)
    bb = _pick_batch_block(n, batch_block)
    grid = (n // bb,)

    # Glue: NCHW -> (N, HWp, E); one-time casts/pads happen here, once.
    # TODO(synk): this transpose(+pad) is one wrapper-side XLA copy of the activations.
    x_tok = jnp.transpose(x_nchw.reshape(n, c, hw), (0, 2, 1)).astype(cdt)
    pos = params["pos"]
    pos0 = pos[0:1].astype(jnp.float32)                  # (1, E) f32 (class-token add)
    pos_sp = pos[1:].astype(cdt)                         # (HW, E)
    if hwp != hw:
        x_tok = jnp.pad(x_tok, ((0, 0), (0, hwp - hw), (0, 0)))
        pos_sp = jnp.pad(pos_sp, ((0, hwp - hw), (0, 0)))
    wq_t = params["q_w"].T.astype(cdt)                   # (E, E)
    wk_t = params["k_w"].T.astype(cdt)
    wv_t = params["v_w"].T.astype(cdt)
    wc_t = params["c_w"].T.astype(cdt)                   # (E, O)
    bq = params["q_b"].reshape(1, e).astype(jnp.float32)
    bk = params["k_b"].reshape(1, e).astype(jnp.float32)
    bv = params["v_b"].reshape(1, e).astype(jnp.float32)
    bc = params["c_b"].reshape(1, o).astype(jnp.float32)
    # One-hot head-membership selector (exact 0/1, even in bf16): (E, H) / (H, E).
    head_of_lane = jnp.arange(e, dtype=jnp.int32) // hd
    hsel = jax.nn.one_hot(head_of_lane, num_heads, dtype=jnp.float32).astype(cdt)
    hexp = hsel.T

    single_buffer = _supports_single_buffering()
    vmem_limit = _vmem_limit_bytes(bb, hwp, e, o, num_heads, cdt, out_dtype,
                                   single_buffer, vmem_cap)

    def const(shape):
        index_map = lambda *_: (0,) * len(shape)
        if single_buffer:
            return pl.BlockSpec(shape, index_map, pipeline_mode=pl.Buffered(1))
        return pl.BlockSpec(shape, index_map)

    in_specs = [
        pl.BlockSpec((bb, hwp, e), lambda i: (i, 0, 0)),   # x tokens (batch block)
        const((1, e)),            # pos[0]   (f32)
        const((hwp, e)),          # pos[1:]  (cdt, padded)
        const((e, e)),            # Wq^T
        const((1, e)),            # bq
        const((e, e)),            # Wk^T
        const((1, e)),            # bk
        const((e, e)),            # Wv^T
        const((1, e)),            # bv
        const((e, o)),            # Wc^T
        const((1, o)),            # bc
        const((e, num_heads)),    # head selector
        const((num_heads, e)),    # head selector^T
    ]

    kernel = functools.partial(_attn_pool_kernel, num_heads=num_heads,
                               scale=float(hd) ** -0.5, hw_valid=hw)
    call = pl.pallas_call(
        kernel,
        out_shape=jax.ShapeDtypeStruct((n, o), out_dtype),
        grid_spec=pltpu.PrefetchScalarGridSpec(
            num_scalar_prefetch=0,
            grid=grid,
            in_specs=in_specs,
            out_specs=pl.BlockSpec((bb, o), lambda i: (i, 0)),
        ),
        compiler_params=pltpu.CompilerParams(
            dimension_semantics=("parallel",),
            vmem_limit_bytes=vmem_limit),
    )
    return call(x_tok, pos0, pos_sp, wq_t, bq, wk_t, bk, wv_t, bv, wc_t, bc,
                hsel, hexp)


def init_params(key, spacial_dim, embed_dim, output_dim):
    """Deterministic synthetic parameters matching the module's shapes."""
    ks = jax.random.split(key, 9)
    seq_len = spacial_dim * spacial_dim + 1
    bound = 1.0 / (embed_dim ** 0.5)

    def lin_w(k, out_f, in_f):
        return jax.random.uniform(k, (out_f, in_f), jnp.float32, -bound, bound)

    def lin_b(k, out_f):
        return jax.random.uniform(k, (out_f,), jnp.float32, -bound, bound)

    return {
        "pos": jax.random.normal(ks[0], (seq_len, embed_dim), jnp.float32)
               / (embed_dim ** 0.5),
        "q_w": lin_w(ks[1], embed_dim, embed_dim), "q_b": lin_b(ks[2], embed_dim),
        "k_w": lin_w(ks[3], embed_dim, embed_dim), "k_b": lin_b(ks[4], embed_dim),
        "v_w": lin_w(ks[5], embed_dim, embed_dim), "v_b": lin_b(ks[6], embed_dim),
        "c_w": lin_w(ks[7], output_dim, embed_dim), "c_b": lin_b(ks[8], output_dim),
    }


def reference_attention_pool_2d(x_nchw, params, num_heads):
    """Pure-JAX replica of the PyTorch forward (for correctness check)."""
    n, c, h, w = x_nchw.shape
    hw = h * w
    x = jnp.transpose(x_nchw.reshape(n, c, hw), (2, 0, 1))           # (HW, N, C)
    x = jnp.concatenate([x.mean(axis=0, keepdims=True), x], axis=0)  # (L, N, C)
    x = x + params["pos"][:, None, :]
    seq_len = x.shape[0]
    e = c
    hd = e // num_heads
    scale = hd ** -0.5
    q = (x @ params["q_w"].T + params["q_b"]) * scale
    k = x @ params["k_w"].T + params["k_b"]
    v = x @ params["v_w"].T + params["v_b"]
    q = q.reshape(seq_len, n, num_heads, hd)
    k = k.reshape(seq_len, n, num_heads, hd)
    v = v.reshape(seq_len, n, num_heads, hd)
    scores = jnp.einsum("qnhd,knhd->nhqk", q, k)
    p = jax.nn.softmax(scores, axis=-1)
    o = jnp.einsum("nhqk,knhd->qnhd", p, v).reshape(seq_len, n, e)
    out = o @ params["c_w"].T + params["c_b"]
    return out[0]


if __name__ == "__main__":
    def run_case(key, batch, embed_dim, spacial_dim, num_heads, output_dim):
        k_x, k_p = jax.random.split(key)
        x = jax.random.normal(
            k_x, (batch, embed_dim, spacial_dim, spacial_dim), jnp.float32)
        params = init_params(k_p, spacial_dim, embed_dim, output_dim)
        ref = reference_attention_pool_2d(x, params, num_heads)

        # f32 debug path (tight check: exact reciprocal, f32 everywhere).
        out_f32 = jax.block_until_ready(
            attention_pool_2d(x, params, num_heads, compute_dtype=jnp.float32))
        assert out_f32.shape == (batch, output_dim), out_f32.shape
        err = float(jnp.max(jnp.abs(out_f32 - ref)))
        assert err < 2e-3, f"f32 max abs err {err}"

        # Default path: bf16 MXU operands, f32 accumulation (looser check).
        out_bf = jax.block_until_ready(attention_pool_2d(x, params, num_heads))
        err_bf = float(jnp.max(jnp.abs(out_bf.astype(jnp.float32) - ref)))
        assert err_bf < 2e-1, f"bf16 max abs err {err_bf}"

    key = jax.random.PRNGKey(0)
    k1, k2 = jax.random.split(key)
    # Case 1: HW = 4*4 = 16, already sublane-aligned; batch block 8 -> grid 2.
    run_case(k1, 16, 32, 4, 4, 16)
    # Case 2: HW = 3*3 = 9 -> padded to 16; exercises the padded-key softmax mask.
    run_case(k2, 8, 64, 3, 4, 32)
    print("KERNEL_OK")
</pallas_src>

<mosaic_0001>
module attributes {stable_mosaic.version = 11 : i64} {
  func.func @_attn_pool_kernel(%arg0: i32, %arg1: memref<8x16x32xf32, #tpu.memory_space<vmem>>, %arg2: memref<1x32xf32, #tpu.memory_space<vmem>>, %arg3: memref<16x32xf32, #tpu.memory_space<vmem>>, %arg4: memref<32x32xf32, #tpu.memory_space<vmem>>, %arg5: memref<1x32xf32, #tpu.memory_space<vmem>>, %arg6: memref<32x32xf32, #tpu.memory_space<vmem>>, %arg7: memref<1x32xf32, #tpu.memory_space<vmem>>, %arg8: memref<32x32xf32, #tpu.memory_space<vmem>>, %arg9: memref<1x32xf32, #tpu.memory_space<vmem>>, %arg10: memref<32x16xf32, #tpu.memory_space<vmem>>, %arg11: memref<1x16xf32, #tpu.memory_space<vmem>>, %arg12: memref<32x4xf32, #tpu.memory_space<vmem>>, %arg13: memref<4x32xf32, #tpu.memory_space<vmem>>, %arg14: memref<8x16xf32, #tpu.memory_space<vmem>>) attributes {dimension_semantics = [#tpu.dimension_semantics<parallel>], iteration_bounds = array<i64: 2>, scalar_prefetch = 0 : i64, scratch_operands = 0 : i64, tpu.core_type = #tpu.core_type<tc>, window_params = [{transform_indices = @transform_0, window_bounds = array<i64: 8, 16, 32>}, {pipeline_mode = #tpu.pipeline_mode<synchronous>, transform_indices = @transform_1, window_bounds = array<i64: 1, 32>}, {pipeline_mode = #tpu.pipeline_mode<synchronous>, transform_indices = @transform_2, window_bounds = array<i64: 16, 32>}, {pipeline_mode = #tpu.pipeline_mode<synchronous>, transform_indices = @transform_3, window_bounds = array<i64: 32, 32>}, {pipeline_mode = #tpu.pipeline_mode<synchronous>, transform_indices = @transform_4, window_bounds = array<i64: 1, 32>}, {pipeline_mode = #tpu.pipeline_mode<synchronous>, transform_indices = @transform_5, window_bounds = array<i64: 32, 32>}, {pipeline_mode = #tpu.pipeline_mode<synchronous>, transform_indices = @transform_6, window_bounds = array<i64: 1, 32>}, {pipeline_mode = #tpu.pipeline_mode<synchronous>, transform_indices = @transform_7, window_bounds = array<i64: 32, 32>}, {pipeline_mode = #tpu.pipeline_mode<synchronous>, transform_indices = @transform_8, window_bounds = array<i64: 1, 32>}, {pipeline_mode = #tpu.pipeline_mode<synchronous>, transform_indices = @transform_9, window_bounds = array<i64: 32, 16>}, {pipeline_mode = #tpu.pipeline_mode<synchronous>, transform_indices = @transform_10, window_bounds = array<i64: 1, 16>}, {pipeline_mode = #tpu.pipeline_mode<synchronous>, transform_indices = @transform_11, window_bounds = array<i64: 32, 4>}, {pipeline_mode = #tpu.pipeline_mode<synchronous>, transform_indices = @transform_12, window_bounds = array<i64: 4, 32>}, {transform_indices = @transform_13, window_bounds = array<i64: 8, 16>}]} {
    %c0 = arith.constant 0 : index
    %c0_0 = arith.constant 0 : index
    %c0_1 = arith.constant 0 : index
    %0 = vector.load %arg1[%c0, %c0_0, %c0_1] : memref<8x16x32xf32, #tpu.memory_space<vmem>>, vector<8x16x32xf32>
    %cst = arith.constant dense<0.000000e+00> : vector<8x32xf32>
    %1 = vector.multi_reduction <add>, %0, %cst [1] : vector<8x16x32xf32> to vector<8x32xf32>
    %cst_2 = arith.constant 6.250000e-02 : f32
    %2 = vector.broadcast %cst_2 : f32 to vector<8x32xf32>
    %3 = arith.mulf %1, %2 : vector<8x32xf32>
    %c0_3 = arith.constant 0 : index
    %c0_4 = arith.constant 0 : index
    %4 = vector.load %arg2[%c0_3, %c0_4] : memref<1x32xf32, #tpu.memory_space<vmem>>, vector<1x32xf32>
    %5 = vector.broadcast %4 : vector<1x32xf32> to vector<8x32xf32>
    %6 = arith.addf %3, %5 : vector<8x32xf32>
    %c0_5 = arith.constant 0 : index
    %c0_6 = arith.constant 0 : index
    %7 = vector.load %arg3[%c0_5, %c0_6] : memref<16x32xf32, #tpu.memory_space<vmem>>, vector<16x32xf32>
    %8 = vector.shape_cast %7 : vector<16x32xf32> to vector<1x16x32xf32>
    %9 = vector.broadcast %8 : vector<1x16x32xf32> to vector<8x16x32xf32>
    %10 = arith.addf %0, %9 : vector<8x16x32xf32>
    %11 = vector.shape_cast %10 : vector<8x16x32xf32> to vector<128x32xf32>
    %c0_7 = arith.constant 0 : index
    %c0_8 = arith.constant 0 : index
    %12 = vector.load %arg4[%c0_7, %c0_8] : memref<32x32xf32, #tpu.memory_space<vmem>>, vector<32x32xf32>
    %c0_9 = arith.constant 0 : index
    %c0_10 = arith.constant 0 : index
    %13 = vector.load %arg6[%c0_9, %c0_10] : memref<32x32xf32, #tpu.memory_space<vmem>>, vector<32x32xf32>
    %c0_11 = arith.constant 0 : index
    %c0_12 = arith.constant 0 : index
    %14 = vector.load %arg8[%c0_11, %c0_12] : memref<32x32xf32, #tpu.memory_space<vmem>>, vector<32x32xf32>
    %cst_13 = arith.constant dense<0.000000e+00> : vector<8x32xf32>
    %15 = tpu.matmul %6, %12, %cst_13 {dimension_numbers = #tpu.dot_dimension_numbers<[1], [0], [0], [1], [0, 0, 1, 1], [], []>} : vector<8x32xf32>, vector<32x32xf32>, vector<8x32xf32> -> vector<8x32xf32>
    %c0_14 = arith.constant 0 : index
    %c0_15 = arith.constant 0 : index
    %16 = vector.load %arg5[%c0_14, %c0_15] : memref<1x32xf32, #tpu.memory_space<vmem>>, vector<1x32xf32>
    %17 = vector.broadcast %16 : vector<1x32xf32> to vector<8x32xf32>
    %18 = arith.addf %15, %17 : vector<8x32xf32>
    %cst_16 = arith.constant 0.353553385 : f32
    %19 = vector.broadcast %cst_16 : f32 to vector<8x32xf32>
    %20 = arith.mulf %18, %19 : vector<8x32xf32>
    %cst_17 = arith.constant dense<0.000000e+00> : vector<8x32xf32>
    %21 = tpu.matmul %6, %13, %cst_17 {dimension_numbers = #tpu.dot_dimension_numbers<[1], [0], [0], [1], [0, 0, 1, 1], [], []>} : vector<8x32xf32>, vector<32x32xf32>, vector<8x32xf32> -> vector<8x32xf32>
    %c0_18 = arith.constant 0 : index
    %c0_19 = arith.constant 0 : index
    %22 = vector.load %arg7[%c0_18, %c0_19] : memref<1x32xf32, #tpu.memory_space<vmem>>, vector<1x32xf32>
    %23 = vector.broadcast %22 : vector<1x32xf32> to vector<8x32xf32>
    %24 = arith.addf %21, %23 : vector<8x32xf32>
    %cst_20 = arith.constant dense<0.000000e+00> : vector<8x32xf32>
    %25 = tpu.matmul %6, %14, %cst_20 {dimension_numbers = #tpu.dot_dimension_numbers<[1], [0], [0], [1], [0, 0, 1, 1], [], []>} : vector<8x32xf32>, vector<32x32xf32>, vector<8x32xf32> -> vector<8x32xf32>
    %c0_21 = arith.constant 0 : index
    %c0_22 = arith.constant 0 : index
    %26 = vector.load %arg9[%c0_21, %c0_22] : memref<1x32xf32, #tpu.memory_space<vmem>>, vector<1x32xf32>
    %27 = vector.broadcast %26 : vector<1x32xf32> to vector<8x32xf32>
    %28 = arith.addf %25, %27 : vector<8x32xf32>
    %cst_23 = arith.constant dense<0.000000e+00> : vector<128x32xf32>
    %29 = tpu.matmul %11, %13, %cst_23 {dimension_numbers = #tpu.dot_dimension_numbers<[1], [0], [0], [1], [0, 0, 1, 1], [], []>} : vector<128x32xf32>, vector<32x32xf32>, vector<128x32xf32> -> vector<128x32xf32>
    %c0_24 = arith.constant 0 : index
    %c0_25 = arith.constant 0 : index
    %30 = vector.load %arg7[%c0_24, %c0_25] : memref<1x32xf32, #tpu.memory_space<vmem>>, vector<1x32xf32>
    %31 = vector.broadcast %30 : vector<1x32xf32> to vector<128x32xf32>
    %32 = arith.addf %29, %31 : vector<128x32xf32>
    %cst_26 = arith.constant dense<0.000000e+00> : vector<128x32xf32>
    %33 = tpu.matmul %11, %14, %cst_26 {dimension_numbers = #tpu.dot_dimension_numbers<[1], [0], [0], [1], [0, 0, 1, 1], [], []>} : vector<128x32xf32>, vector<32x32xf32>, vector<128x32xf32> -> vector<128x32xf32>
    %c0_27 = arith.constant 0 : index
    %c0_28 = arith.constant 0 : index
    %34 = vector.load %arg9[%c0_27, %c0_28] : memref<1x32xf32, #tpu.memory_space<vmem>>, vector<1x32xf32>
    %35 = vector.broadcast %34 : vector<1x32xf32> to vector<128x32xf32>
    %36 = arith.addf %33, %35 : vector<128x32xf32>
    %c0_29 = arith.constant 0 : index
    %c0_30 = arith.constant 0 : index
    %37 = vector.load %arg12[%c0_29, %c0_30] : memref<32x4xf32, #tpu.memory_space<vmem>>, vector<32x4xf32>
    %38 = vector.shape_cast %32 : vector<128x32xf32> to vector<8x16x32xf32>
    %39 = vector.shape_cast %20 : vector<8x32xf32> to vector<8x1x32xf32>
    %40 = vector.broadcast %39 : vector<8x1x32xf32> to vector<8x16x32xf32>
    %41 = arith.mulf %38, %40 : vector<8x16x32xf32>
    %42 = vector.shape_cast %41 : vector<8x16x32xf32> to vector<128x32xf32>
    %cst_31 = arith.constant dense<0.000000e+00> : vector<128x4xf32>
    %43 = tpu.matmul %42, %37, %cst_31 {dimension_numbers = #tpu.dot_dimension_numbers<[1], [0], [0], [1], [0, 0, 1, 1], [], []>} : vector<128x32xf32>, vector<32x4xf32>, vector<128x4xf32> -> vector<128x4xf32>
    %44 = vector.shape_cast %43 : vector<128x4xf32> to vector<8x16x4xf32>
    %45 = arith.mulf %24, %20 : vector<8x32xf32>
    %cst_32 = arith.constant dense<0.000000e+00> : vector<8x4xf32>
    %46 = tpu.matmul %45, %37, %cst_32 {dimension_numbers = #tpu.dot_dimension_numbers<[1], [0], [0], [1], [0, 0, 1, 1], [], []>} : vector<8x32xf32>, vector<32x4xf32>, vector<8x4xf32> -> vector<8x4xf32>
    %cst_33 = arith.constant dense<0xFF800000> : vector<8x4xf32>
    %47 = vector.multi_reduction <maximumf>, %44, %cst_33 [1] : vector<8x16x4xf32> to vector<8x4xf32>
    %48 = arith.maximumf %47, %46 : vector<8x4xf32>
    %49 = vector.shape_cast %48 : vector<8x4xf32> to vector<8x1x4xf32>
    %50 = vector.broadcast %49 : vector<8x1x4xf32> to vector<8x16x4xf32>
    %51 = arith.subf %44, %50 : vector<8x16x4xf32>
    %52 = math.exp %51 : vector<8x16x4xf32>
    %53 = arith.subf %46, %48 : vector<8x4xf32>
    %54 = math.exp %53 : vector<8x4xf32>
    %cst_34 = arith.constant dense<0.000000e+00> : vector<8x4xf32>
    %55 = vector.multi_reduction <add>, %52, %cst_34 [1] : vector<8x16x4xf32> to vector<8x4xf32>
    %56 = arith.addf %54, %55 : vector<8x4xf32>
    %57 = tpu.reciprocal %56 : vector<8x4xf32> -> vector<8x4xf32>
    %c0_35 = arith.constant 0 : index
    %c0_36 = arith.constant 0 : index
    %58 = vector.load %arg13[%c0_35, %c0_36] : memref<4x32xf32, #tpu.memory_space<vmem>>, vector<4x32xf32>
    %59 = vector.shape_cast %57 : vector<8x4xf32> to vector<8x1x4xf32>
    %60 = vector.broadcast %59 : vector<8x1x4xf32> to vector<8x16x4xf32>
    %61 = arith.mulf %52, %60 : vector<8x16x4xf32>
    %62 = vector.shape_cast %61 : vector<8x16x4xf32> to vector<128x4xf32>
    %cst_37 = arith.constant dense<0.000000e+00> : vector<128x32xf32>
    %63 = tpu.matmul %62, %58, %cst_37 {dimension_numbers = #tpu.dot_dimension_numbers<[1], [0], [0], [1], [0, 0, 1, 1], [], []>} : vector<128x4xf32>, vector<4x32xf32>, vector<128x32xf32> -> vector<128x32xf32>
    %64 = vector.shape_cast %63 : vector<128x32xf32> to vector<8x16x32xf32>
    %65 = arith.mulf %54, %57 : vector<8x4xf32>
    %cst_38 = arith.constant dense<0.000000e+00> : vector<8x32xf32>
    %66 = tpu.matmul %65, %58, %cst_38 {dimension_numbers = #tpu.dot_dimension_numbers<[1], [0], [0], [1], [0, 0, 1, 1], [], []>} : vector<8x4xf32>, vector<4x32xf32>, vector<8x32xf32> -> vector<8x32xf32>
    %67 = arith.mulf %66, %28 : vector<8x32xf32>
    %68 = vector.shape_cast %36 : vector<128x32xf32> to vector<8x16x32xf32>
    %69 = arith.mulf %64, %68 : vector<8x16x32xf32>
    %cst_39 = arith.constant dense<0.000000e+00> : vector<8x32xf32>
    %70 = vector.multi_reduction <add>, %69, %cst_39 [1] : vector<8x16x32xf32> to vector<8x32xf32>
    %71 = arith.addf %67, %70 : vector<8x32xf32>
    %c0_40 = arith.constant 0 : index
    %c0_41 = arith.constant 0 : index
    %72 = vector.load %arg10[%c0_40, %c0_41] : memref<32x16xf32, #tpu.memory_space<vmem>>, vector<32x16xf32>
    %cst_42 = arith.constant dense<0.000000e+00> : vector<8x16xf32>
    %73 = tpu.matmul %71, %72, %cst_42 {dimension_numbers = #tpu.dot_dimension_numbers<[1], [0], [0], [1], [0, 0, 1, 1], [], []>} : vector<8x32xf32>, vector<32x16xf32>, vector<8x16xf32> -> vector<8x16xf32>
    %c0_43 = arith.constant 0 : index
    %c0_44 = arith.constant 0 : index
    %74 = vector.load %arg11[%c0_43, %c0_44] : memref<1x16xf32, #tpu.memory_space<vmem>>, vector<1x16xf32>
    %75 = vector.broadcast %74 : vector<1x16xf32> to vector<8x16xf32>
    %76 = arith.addf %73, %75 : vector<8x16xf32>
    %c0_45 = arith.constant 0 : index
    %c0_46 = arith.constant 0 : index
    %77 = vector.load %arg14[%c0_45, %c0_46] : memref<8x16xf32, #tpu.memory_space<vmem>>, vector<8x16xf32>
    tpu.vector_store %arg14[%c0_45, %c0_46], %76 {strides = array<i32>} : memref<8x16xf32, #tpu.memory_space<vmem>>, vector<8x16xf32>,
    return
  }
  func.func @transform_0(%arg0: i32) -> (i32, i32, i32) {
    %c0_i32 = arith.constant 0 : i32
    %c0_i32_0 = arith.constant 0 : i32
    %c0_i32_1 = arith.constant 0 : i32
    return %arg0, %c0_i32, %c0_i32_0 : i32, i32, i32
  }
  func.func @transform_1(%arg0: i32) -> (i32, i32) {
    %c0_i32 = arith.constant 0 : i32
    %c0_i32_0 = arith.constant 0 : i32
    %c0_i32_1 = arith.constant 0 : i32
    return %c0_i32, %c0_i32_0 : i32, i32
  }
  func.func @transform_2(%arg0: i32) -> (i32, i32) {
    %c0_i32 = arith.constant 0 : i32
    %c0_i32_0 = arith.constant 0 : i32
    %c0_i32_1 = arith.constant 0 : i32
    return %c0_i32, %c0_i32_0 : i32, i32
  }
  func.func @transform_3(%arg0: i32) -> (i32, i32) {
    %c0_i32 = arith.constant 0 : i32
    %c0_i32_0 = arith.constant 0 : i32
    %c0_i32_1 = arith.constant 0 : i32
    return %c0_i32, %c0_i32_0 : i32, i32
  }
  func.func @transform_4(%arg0: i32) -> (i32, i32) {
    %c0_i32 = arith.constant 0 : i32
    %c0_i32_0 = arith.constant 0 : i32
    %c0_i32_1 = arith.constant 0 : i32
    return %c0_i32, %c0_i32_0 : i32, i32
  }
  func.func @transform_5(%arg0: i32) -> (i32, i32) {
    %c0_i32 = arith.constant 0 : i32
    %c0_i32_0 = arith.constant 0 : i32
    %c0_i32_1 = arith.constant 0 : i32
    return %c0_i32, %c0_i32_0 : i32, i32
  }
  func.func @transform_6(%arg0: i32) -> (i32, i32) {
    %c0_i32 = arith.constant 0 : i32
    %c0_i32_0 = arith.constant 0 : i32
    %c0_i32_1 = arith.constant 0 : i32
    return %c0_i32, %c0_i32_0 : i32, i32
  }
  func.func @transform_7(%arg0: i32) -> (i32, i32) {
    %c0_i32 = arith.constant 0 : i32
    %c0_i32_0 = arith.constant 0 : i32
    %c0_i32_1 = arith.constant 0 : i32
    return %c0_i32, %c0_i32_0 : i32, i32
  }
  func.func @transform_8(%arg0: i32) -> (i32, i32) {
    %c0_i32 = arith.constant 0 : i32
    %c0_i32_0 = arith.constant 0 : i32
    %c0_i32_1 = arith.constant 0 : i32
    return %c0_i32, %c0_i32_0 : i32, i32
  }
  func.func @transform_9(%arg0: i32) -> (i32, i32) {
    %c0_i32 = arith.constant 0 : i32
    %c0_i32_0 = arith.constant 0 : i32
    %c0_i32_1 = arith.constant 0 : i32
    return %c0_i32, %c0_i32_0 : i32, i32
  }
  func.func @transform_10(%arg0: i32) -> (i32, i32) {
    %c0_i32 = arith.constant 0 : i32
    %c0_i32_0 = arith.constant 0 : i32
    %c0_i32_1 = arith.constant 0 : i32
    return %c0_i32, %c0_i32_0 : i32, i32
  }
  func.func @transform_11(%arg0: i32) -> (i32, i32) {
    %c0_i32 = arith.constant 0 : i32
    %c0_i32_0 = arith.constant 0 : i32
    %c0_i32_1 = arith.constant 0 : i32
    return %c0_i32, %c0_i32_0 : i32, i32
  }
  func.func @transform_12(%arg0: i32) -> (i32, i32) {
    %c0_i32 = arith.constant 0 : i32
    %c0_i32_0 = arith.constant 0 : i32
    %c0_i32_1 = arith.constant 0 : i32
    return %c0_i32, %c0_i32_0 : i32, i32
  }
  func.func @transform_13(%arg0: i32) -> (i32, i32) {
    %c0_i32 = arith.constant 0 : i32
    %c0_i32_0 = arith.constant 0 : i32
    return %arg0, %c0_i32 : i32, i32
  }
}

</mosaic_0001>

<llo_original>
// kernel: tpu_custom_call.1
$region0: #{tpu_custom_call.1}
  #allocation0 [shape = 'u32[]', space=smem, size = 0x4, offset = 0x4, fixed_abs, tag = 'smem constant byte address 0x4 - core index']
  #allocation1 [shape = 'u32[72,128]{1,0:T(1,128)}', space=vmem, size = 0x9000, scoped, tag = 'internal scratch']
  %s0 = inlined_call_operand.hbm [shape: f32[16,16,32], index: 0, kind: input, shape index: {}]
  %s1 = inlined_call_operand.hbm [shape: f32[1,32], index: 1, kind: input, shape index: {}]
  %s2 = inlined_call_operand.vmem [shape: f32[16,32], index: 2, kind: input, shape index: {}]
  %s3 = inlined_call_operand.vmem [shape: f32[32,32], index: 3, kind: input, shape index: {}]
  %s4 = inlined_call_operand.hbm [shape: f32[1,32], index: 4, kind: input, shape index: {}]
  %s5 = inlined_call_operand.vmem [shape: f32[32,32], index: 5, kind: input, shape index: {}]
  %s6 = inlined_call_operand.vmem [shape: f32[1,32], index: 6, kind: input, shape index: {}]
  %s7 = inlined_call_operand.hbm [shape: f32[32,32], index: 7, kind: input, shape index: {}]
  %s8 = inlined_call_operand.vmem [shape: f32[1,32], index: 8, kind: input, shape index: {}]
  %s9 = inlined_call_operand.vmem [shape: f32[32,16], index: 9, kind: input, shape index: {}]
  %s10 = inlined_call_operand.vmem [shape: f32[1,16], index: 10, kind: input, shape index: {}]
  %s11 = inlined_call_operand.vmem [shape: f32[32,4], index: 11, kind: input, shape index: {}]
  %s12 = inlined_call_operand.vmem [shape: f32[4,32], index: 12, kind: input, shape index: {}]
  %s13 = inlined_call_operand.hbm [shape: f32[16,16], index: 13, kind: output, shape index: {}]
  %s14 = sld [smem:[#allocation0]]
  $region101: #{tpu_custom_call.1} parent=0
    _
  %s16 = ssub.s32 1, %s14
  %s17 = scalar_select 0, %s16, %s14
  $region1: #{tpu_custom_call.1} parent=0
    #allocation2 [shape = 'u8[131072]{0}', space=vmem, size = 0x20000, scoped, tag = 'input window, operand 0']
    #allocation3 [shape = 's32[2]{0}', space=sflag, size = 0x8, scoped, tag = 'scoped memory for tpu_custom_call.1']
    #allocation4 [shape = 's32[2]{0}', space=sflag, size = 0x8, scoped, tag = 'scoped memory for tpu_custom_call.1']
    #allocation5 [shape = 'u8[512]{0}', space=vmem, size = 0x400, scoped, tag = 'input window, operand 1, single buffered']
    #allocation6 [shape = 's32[1]{0}', space=sflag, size = 0x4, scoped, tag = 'scoped memory for tpu_custom_call.1']
    #allocation7 [shape = 'u8[512]{0}', space=vmem, size = 0x400, scoped, tag = 'input window, operand 4, single buffered']
    #allocation8 [shape = 'u8[16384]{0}', space=vmem, size = 0x4000, scoped, tag = 'input window, operand 7, single buffered']
    #allocation9 [shape = 's32[1]{0}', space=sflag, size = 0x4, scoped, tag = 'scoped memory for tpu_custom_call.1']
    #allocation10 [shape = 'u8[8192]{0}', space=vmem, size = 0x2000, scoped, tag = 'output window, operand 0']
    %18 = vsyncpa [#allocation3], 0
    %s19 = scalar_lea.sflag [#allocation3], 1
    %20 = vsyncpa %s19, 0
    %21 = vsyncpa [#allocation6], 0
    %22 = vsyncpa [#allocation9], 0
    %23 = vsyncpa [#allocation4], 0
    %s24 = scalar_lea.sflag [#allocation4], 1
    %25 = vsyncpa %s24, 0
    loop: start=0, step=1, limit=4
    $region2: #{tpu_custom_call.1} parent=1 // loop_pre_header
      _
    $region3: #{tpu_custom_call.1} parent=1 // loop_header
      %s27 = sphi 0, %s31
      %p28 = scmp.ge.s32.totalorder %s27, 4
      %s37 = sphi 0, %s39
      %s40 = sphi 0, %s37
      %s41 = sphi 0, %s40
      %s57 = sphi 0, %s41
      %s61 = sphi 0, %s61
      %s63 = sphi 0, %s61
      %s64 = sphi 0, %s63
      %s78 = sphi 0, %s64
      %s82 = sphi 0, %s82
      %s84 = sphi 0, %s82
      %s85 = sphi 0, %s84
      %s99 = sphi 0, %s85
      %s103 = sphi 0, %s103
      %s105 = sphi 0, %s103
      %s106 = sphi 0, %s105
      %s120 = sphi 0, %s106
      %s124 = sphi 0, %s124
      %s126 = sphi 0, %s124
      %s127 = sphi 0, %s126
      %s141 = sphi 0, %s127
      %s145 = sphi 0, %s145
      %s147 = sphi 0, %s145
      %s148 = sphi 0, %s147
      %s162 = sphi 0, %s148
      %s166 = sphi 0, %s166
      %s168 = sphi 0, %s166
      %s169 = sphi 0, %s168
      %s183 = sphi 0, %s169
      %s187 = sphi 0, %s187
      %s189 = sphi 0, %s187
      %s190 = sphi 0, %s189
      %s204 = sphi 0, %s190
      %s208 = sphi 0, %s208
      %s210 = sphi 0, %s208
      %s211 = sphi 0, %s210
      %s225 = sphi 0, %s211
      %s229 = sphi 0, %s229
      %s231 = sphi 0, %s229
      %s232 = sphi 0, %s231
      %s246 = sphi 0, %s232
      %s250 = sphi 0, %s250
      %s252 = sphi 0, %s250
      %s253 = sphi 0, %s252
      %s267 = sphi 0, %s253
      %s271 = sphi 0, %s271
      %s273 = sphi 0, %s271
      %s274 = sphi 0, %s273
      %s288 = sphi 0, %s274
      %s292 = sphi 0, %s292
      %s294 = sphi 0, %s292
      %s295 = sphi 0, %s294
      %s309 = sphi 0, %s295
      %s315 = sphi 0, %s317
      %s318 = sphi 0, %s315
      %s319 = sphi 0, %s318
      %s335 = sphi 0, %s319
    $region4: #{tpu_custom_call.1} parent=1 // loop_header_branch
      %30 = sbr.rel (%p28) target = $region8
    $region5: #{tpu_custom_call.1} parent=1 // loop_body
      %s32 = ssub.s32 %s27, 1
      %s33 = ssub.s32 %s27, 2
      %s34 = sadd.s32 %s27, 1
      %s35 = ssub.s32 %s27, %s34
      %p36 = scmp.eq.s32.totalorder %s35, 0
      %s38 = sadd.s32 %s37, 1
      %s39 = scalar_select %p36, %s37, %s38
      %p42 = pneg %p36
      %p43 = scmp.eq.s32.totalorder %s27, 1
      %p44 = por %p42, %p43
      %p45 = scmp.ne.s32.totalorder %s37, %s40
      %p46 = scmp.eq.s32.totalorder %s27, 0
      %p47 = por %p45, %p46
      %p48 = scmp.ne.s32.totalorder %s37, %s40
      %p49 = scmp.eq.s32.totalorder %s32, 1
      %p50 = por %p48, %p49
      %p51 = scmp.ne.s32.totalorder %s40, %s41
      %p52 = scmp.eq.s32.totalorder %s32, 0
      %p53 = por %p51, %p52
      %p54 = scmp.ne.s32.totalorder %s40, %s41
      %p55 = scmp.eq.s32.totalorder %s33, 1
      %p56 = por %p54, %p55
      %p58 = scmp.ne.s32.totalorder %s41, %s57
      %p59 = scmp.eq.s32.totalorder %s33, 0
      %p60 = por %p58, %p59
      %s62 = sadd.s32 %s61, 1
      %p65 = scmp.eq.s32.totalorder %s27, 1
      %p66 = scmp.ne.s32.totalorder %s61, %s63
      %p67 = scmp.eq.s32.totalorder %s27, 0
      %p68 = por %p66, %p67
      %p69 = scmp.ne.s32.totalorder %s61, %s63
      %p70 = scmp.eq.s32.totalorder %s32, 1
      %p71 = por %p69, %p70
      %p72 = scmp.ne.s32.totalorder %s63, %s64
      %p73 = scmp.eq.s32.totalorder %s32, 0
      %p74 = por %p72, %p73
      %p75 = scmp.ne.s32.totalorder %s63, %s64
      %p76 = scmp.eq.s32.totalorder %s33, 1
      %p77 = por %p75, %p76
      %p79 = scmp.ne.s32.totalorder %s64, %s78
      %p80 = scmp.eq.s32.totalorder %s33, 0
      %p81 = por %p79, %p80
      %s83 = sadd.s32 %s82, 1
      %p86 = scmp.eq.s32.totalorder %s27, 1
      %p87 = scmp.ne.s32.totalorder %s82, %s84
      %p88 = scmp.eq.s32.totalorder %s27, 0
      %p89 = por %p87, %p88
      %p90 = scmp.ne.s32.totalorder %s82, %s84
      %p91 = scmp.eq.s32.totalorder %s32, 1
      %p92 = por %p90, %p91
      %p93 = scmp.ne.s32.totalorder %s84, %s85
      %p94 = scmp.eq.s32.totalorder %s32, 0
      %p95 = por %p93, %p94
      %p96 = scmp.ne.s32.totalorder %s84, %s85
      %p97 = scmp.eq.s32.totalorder %s33, 1
      %p98 = por %p96, %p97
      %p100 = scmp.ne.s32.totalorder %s85, %s99
      %p101 = scmp.eq.s32.totalorder %s33, 0
      %p102 = por %p100, %p101
      %s104 = sadd.s32 %s103, 1
      %p107 = scmp.eq.s32.totalorder %s27, 1
      %p108 = scmp.ne.s32.totalorder %s103, %s105
      %p109 = scmp.eq.s32.totalorder %s27, 0
      %p110 = por %p108, %p109
      %p111 = scmp.ne.s32.totalorder %s103, %s105
      %p112 = scmp.eq.s32.totalorder %s32, 1
      %p113 = por %p111, %p112
      %p114 = scmp.ne.s32.totalorder %s105, %s106
      %p115 = scmp.eq.s32.totalorder %s32, 0
      %p116 = por %p114, %p115
      %p117 = scmp.ne.s32.totalorder %s105, %s106
      %p118 = scmp.eq.s32.totalorder %s33, 1
      %p119 = por %p117, %p118
      %p121 = scmp.ne.s32.totalorder %s106, %s120
      %p122 = scmp.eq.s32.totalorder %s33, 0
      %p123 = por %p121, %p122
      %s125 = sadd.s32 %s124, 1
      %p128 = scmp.eq.s32.totalorder %s27, 1
      %p129 = scmp.ne.s32.totalorder %s124, %s126
      %p130 = scmp.eq.s32.totalorder %s27, 0
      %p131 = por %p129, %p130
      %p132 = scmp.ne.s32.totalorder %s124, %s126
      %p133 = scmp.eq.s32.totalorder %s32, 1
      %p134 = por %p132, %p133
      %p135 = scmp.ne.s32.totalorder %s126, %s127
      %p136 = scmp.eq.s32.totalorder %s32, 0
      %p137 = por %p135, %p136
      %p138 = scmp.ne.s32.totalorder %s126, %s127
      %p139 = scmp.eq.s32.totalorder %s33, 1
      %p140 = por %p138, %p139
      %p142 = scmp.ne.s32.totalorder %s127, %s141
      %p143 = scmp.eq.s32.totalorder %s33, 0
      %p144 = por %p142, %p143
      %s146 = sadd.s32 %s145, 1
      %p149 = scmp.eq.s32.totalorder %s27, 1
      %p150 = scmp.ne.s32.totalorder %s145, %s147
      %p151 = scmp.eq.s32.totalorder %s27, 0
      %p152 = por %p150, %p151
      %p153 = scmp.ne.s32.totalorder %s145, %s147
      %p154 = scmp.eq.s32.totalorder %s32, 1
      %p155 = por %p153, %p154
      %p156 = scmp.ne.s32.totalorder %s147, %s148
      %p157 = scmp.eq.s32.totalorder %s32, 0
      %p158 = por %p156, %p157
      %p159 = scmp.ne.s32.totalorder %s147, %s148
      %p160 = scmp.eq.s32.totalorder %s33, 1
      %p161 = por %p159, %p160
      %p163 = scmp.ne.s32.totalorder %s148, %s162
      %p164 = scmp.eq.s32.totalorder %s33, 0
      %p165 = por %p163, %p164
      %s167 = sadd.s32 %s166, 1
      %p170 = scmp.eq.s32.totalorder %s27, 1
      %p171 = scmp.ne.s32.totalorder %s166, %s168
      %p172 = scmp.eq.s32.totalorder %s27, 0
      %p173 = por %p171, %p172
      %p174 = scmp.ne.s32.totalorder %s166, %s168
      %p175 = scmp.eq.s32.totalorder %s32, 1
      %p176 = por %p174, %p175
      %p177 = scmp.ne.s32.totalorder %s168, %s169
      %p178 = scmp.eq.s32.totalorder %s32, 0
      %p179 = por %p177, %p178
      %p180 = scmp.ne.s32.totalorder %s168, %s169
      %p181 = scmp.eq.s32.totalorder %s33, 1
      %p182 = por %p180, %p181
      %p184 = scmp.ne.s32.totalorder %s169, %s183
      %p185 = scmp.eq.s32.totalorder %s33, 0
      %p186 = por %p184, %p185
      %s188 = sadd.s32 %s187, 1
      %p191 = scmp.eq.s32.totalorder %s27, 1
      %p192 = scmp.ne.s32.totalorder %s187, %s189
      %p193 = scmp.eq.s32.totalorder %s27, 0
      %p194 = por %p192, %p193
      %p195 = scmp.ne.s32.totalorder %s187, %s189
      %p196 = scmp.eq.s32.totalorder %s32, 1
      %p197 = por %p195, %p196
      %p198 = scmp.ne.s32.totalorder %s189, %s190
      %p199 = scmp.eq.s32.totalorder %s32, 0
      %p200 = por %p198, %p199
      %p201 = scmp.ne.s32.totalorder %s189, %s190
      %p202 = scmp.eq.s32.totalorder %s33, 1
      %p203 = por %p201, %p202
      %p205 = scmp.ne.s32.totalorder %s190, %s204
      %p206 = scmp.eq.s32.totalorder %s33, 0
      %p207 = por %p205, %p206
      %s209 = sadd.s32 %s208, 1
      %p212 = scmp.eq.s32.totalorder %s27, 1
      %p213 = scmp.ne.s32.totalorder %s208, %s210
      %p214 = scmp.eq.s32.totalorder %s27, 0
      %p215 = por %p213, %p214
      %p216 = scmp.ne.s32.totalorder %s208, %s210
      %p217 = scmp.eq.s32.totalorder %s32, 1
      %p218 = por %p216, %p217
      %p219 = scmp.ne.s32.totalorder %s210, %s211
      %p220 = scmp.eq.s32.totalorder %s32, 0
      %p221 = por %p219, %p220
      %p222 = scmp.ne.s32.totalorder %s210, %s211
      %p223 = scmp.eq.s32.totalorder %s33, 1
      %p224 = por %p222, %p223
      %p226 = scmp.ne.s32.totalorder %s211, %s225
      %p227 = scmp.eq.s32.totalorder %s33, 0
      %p228 = por %p226, %p227
      %s230 = sadd.s32 %s229, 1
      %p233 = scmp.eq.s32.totalorder %s27, 1
      %p234 = scmp.ne.s32.totalorder %s229, %s231
      %p235 = scmp.eq.s32.totalorder %s27, 0
      %p236 = por %p234, %p235
      %p237 = scmp.ne.s32.totalorder %s229, %s231
      %p238 = scmp.eq.s32.totalorder %s32, 1
      %p239 = por %p237, %p238
      %p240 = scmp.ne.s32.totalorder %s231, %s232
      %p241 = scmp.eq.s32.totalorder %s32, 0
      %p242 = por %p240, %p241
      %p243 = scmp.ne.s32.totalorder %s231, %s232
      %p244 = scmp.eq.s32.totalorder %s33, 1
      %p245 = por %p243, %p244
      %p247 = scmp.ne.s32.totalorder %s232, %s246
      %p248 = scmp.eq.s32.totalorder %s33, 0
      %p249 = por %p247, %p248
      %s251 = sadd.s32 %s250, 1
      %p254 = scmp.eq.s32.totalorder %s27, 1
      %p255 = scmp.ne.s32.totalorder %s250, %s252
      %p256 = scmp.eq.s32.totalorder %s27, 0
      %p257 = por %p255, %p256
      %p258 = scmp.ne.s32.totalorder %s250, %s252
      %p259 = scmp.eq.s32.totalorder %s32, 1
      %p260 = por %p258, %p259
      %p261 = scmp.ne.s32.totalorder %s252, %s253
      %p262 = scmp.eq.s32.totalorder %s32, 0
      %p263 = por %p261, %p262
      %p264 = scmp.ne.s32.totalorder %s252, %s253
      %p265 = scmp.eq.s32.totalorder %s33, 1
      %p266 = por %p264, %p265
      %p268 = scmp.ne.s32.totalorder %s253, %s267
      %p269 = scmp.eq.s32.totalorder %s33, 0
      %p270 = por %p268, %p269
      %s272 = sadd.s32 %s271, 1
      %p275 = scmp.eq.s32.totalorder %s27, 1
      %p276 = scmp.ne.s32.totalorder %s271, %s273
      %p277 = scmp.eq.s32.totalorder %s27, 0
      %p278 = por %p276, %p277
      %p279 = scmp.ne.s32.totalorder %s271, %s273
      %p280 = scmp.eq.s32.totalorder %s32, 1
      %p281 = por %p279, %p280
      %p282 = scmp.ne.s32.totalorder %s273, %s274
      %p283 = scmp.eq.s32.totalorder %s32, 0
      %p284 = por %p282, %p283
      %p285 = scmp.ne.s32.totalorder %s273, %s274
      %p286 = scmp.eq.s32.totalorder %s33, 1
      %p287 = por %p285, %p286
      %p289 = scmp.ne.s32.totalorder %s274, %s288
      %p290 = scmp.eq.s32.totalorder %s33, 0
      %p291 = por %p289, %p290
      %s293 = sadd.s32 %s292, 1
      %p296 = scmp.eq.s32.totalorder %s27, 1
      %p297 = scmp.ne.s32.totalorder %s292, %s294
      %p298 = scmp.eq.s32.totalorder %s27, 0
      %p299 = por %p297, %p298
      %p300 = scmp.ne.s32.totalorder %s292, %s294
      %p301 = scmp.eq.s32.totalorder %s32, 1
      %p302 = por %p300, %p301
      %p303 = scmp.ne.s32.totalorder %s294, %s295
      %p304 = scmp.eq.s32.totalorder %s32, 0
      %p305 = por %p303, %p304
      %p306 = scmp.ne.s32.totalorder %s294, %s295
      %p307 = scmp.eq.s32.totalorder %s33, 1
      %p308 = por %p306, %p307
      %p310 = scmp.ne.s32.totalorder %s295, %s309
      %p311 = scmp.eq.s32.totalorder %s33, 0
      %p312 = por %p310, %p311
      %s313 = ssub.s32 %s27, %s34
      %p314 = scmp.eq.s32.totalorder %s313, 0
      %s316 = sadd.s32 %s315, 1
      %s317 = scalar_select %p314, %s315, %s316
      %p320 = pneg %p314
      %p321 = scmp.eq.s32.totalorder %s27, 1
      %p322 = por %p320, %p321
      %p323 = scmp.ne.s32.totalorder %s315, %s318
      %p324 = scmp.eq.s32.totalorder %s27, 0
      %p325 = por %p323, %p324
      %p326 = scmp.ne.s32.totalorder %s315, %s318
      %p327 = scmp.eq.s32.totalorder %s32, 1
      %p328 = por %p326, %p327
      %p329 = scmp.ne.s32.totalorder %s318, %s319
      %p330 = scmp.eq.s32.totalorder %s32, 0
      %p331 = por %p329, %p330
      %p332 = scmp.ne.s32.totalorder %s318, %s319
      %p333 = scmp.eq.s32.totalorder %s33, 1
      %p334 = por %p332, %p333
      %p336 = scmp.ne.s32.totalorder %s319, %s335
      %p337 = scmp.eq.s32.totalorder %s33, 0
      %p338 = por %p336, %p337
      %p339 = scmp.le.s32.totalorder 1, %s27
      %p340 = scmp.lt.s32.totalorder %s27, 3
      %p341 = pnand %p339, %p340
      %p342 = pneg %p341
      // Predicated region
      $region9: #{tpu_custom_call.1} parent=5 // pred_check
        _
      $region10: #{tpu_custom_call.1} parent=5 // pred_check_branch
        %344 = sbr.rel (%p341) target = $region12
      $region11: #{tpu_custom_call.1} parent=5 // pred_region
        %s345 = ssub.s32 %s27, 1
        // Predicated region
        $region13: #{tpu_custom_call.1} parent=11 // pred_check
          %p346 = pneg %p74
        $region14: #{tpu_custom_call.1} parent=11 // pred_check_branch
          %348 = sbr.rel (%p346) target = $region16
        $region15: #{tpu_custom_call.1} parent=11 // pred_region
          %350 = vsyncadd [#allocation6], 0
          %s352 = sshll.u32 %s1, 4
          %s353 = int_to_ptr.hbm [resolvable:$true] %s352
          %s354 = sshll.u32 [#allocation5], 4
          %s355 = int_to_ptr.vmem [resolvable:$true] %s354
          %357 = dma.hbm_to_vmem [thread:$0]  %s353, 16, %s355, [#allocation6]
        $region16: #{tpu_custom_call.1} parent=11 // pred_fallthru
          _
        // Predicated region
        $region17: #{tpu_custom_call.1} parent=11 // pred_check
          %p358 = pneg %p95
        $region18: #{tpu_custom_call.1} parent=11 // pred_check_branch
          %360 = sbr.rel (%p358) target = $region20
        $region19: #{tpu_custom_call.1} parent=11 // pred_region
          _
        $region20: #{tpu_custom_call.1} parent=11 // pred_fallthru
          _
        // Predicated region
        $region21: #{tpu_custom_call.1} parent=11 // pred_check
          %p361 = pneg %p116
        $region22: #{tpu_custom_call.1} parent=11 // pred_check_branch
          %363 = sbr.rel (%p361) target = $region24
        $region23: #{tpu_custom_call.1} parent=11 // pred_region
          _
        $region24: #{tpu_custom_call.1} parent=11 // pred_fallthru
          _
        // Predicated region
        $region25: #{tpu_custom_call.1} parent=11 // pred_check
          %p364 = pneg %p137
        $region26: #{tpu_custom_call.1} parent=11 // pred_check_branch
          %366 = sbr.rel (%p364) target = $region28
        $region27: #{tpu_custom_call.1} parent=11 // pred_region
          %368 = vsyncadd [#allocation6], 0
          %s370 = sshll.u32 %s4, 4
          %s371 = int_to_ptr.hbm [resolvable:$true] %s370
          %s372 = sshll.u32 [#allocation7], 4
          %s373 = int_to_ptr.vmem [resolvable:$true] %s372
          %375 = dma.hbm_to_vmem [thread:$0]  %s371, 16, %s373, [#allocation6]
        $region28: #{tpu_custom_call.1} parent=11 // pred_fallthru
          _
        // Predicated region
        $region29: #{tpu_custom_call.1} parent=11 // pred_check
          %p376 = pneg %p158
        $region30: #{tpu_custom_call.1} parent=11 // pred_check_branch
          %378 = sbr.rel (%p376) target = $region32
        $region31: #{tpu_custom_call.1} parent=11 // pred_region
          _
        $region32: #{tpu_custom_call.1} parent=11 // pred_fallthru
          _
        // Predicated region
        $region33: #{tpu_custom_call.1} parent=11 // pred_check
          %p379 = pneg %p179
        $region34: #{tpu_custom_call.1} parent=11 // pred_check_branch
          %381 = sbr.rel (%p379) target = $region36
        $region35: #{tpu_custom_call.1} parent=11 // pred_region
          _
        $region36: #{tpu_custom_call.1} parent=11 // pred_fallthru
          _
        // Predicated region
        $region37: #{tpu_custom_call.1} parent=11 // pred_check
          %p382 = pneg %p200
        $region38: #{tpu_custom_call.1} parent=11 // pred_check_branch
          %384 = sbr.rel (%p382) target = $region40
        $region39: #{tpu_custom_call.1} parent=11 // pred_region
          %386 = vsyncadd [#allocation9], 0
          %s387 = sshll.u32 %s7, 4
          %s388 = int_to_ptr.hbm [resolvable:$true] %s387
          %s389 = sshll.u32 [#allocation8], 4
          %s390 = int_to_ptr.vmem [resolvable:$true] %s389
          %395 = dma.hbm_to_vmem [thread:$0]  %s388, 512, %s390, [#allocation9], 128, 128, 8
        $region40: #{tpu_custom_call.1} parent=11 // pred_fallthru
          _
        // Predicated region
        $region41: #{tpu_custom_call.1} parent=11 // pred_check
          %p396 = pneg %p221
        $region42: #{tpu_custom_call.1} parent=11 // pred_check_branch
          %398 = sbr.rel (%p396) target = $region44
        $region43: #{tpu_custom_call.1} parent=11 // pred_region
          _
        $region44: #{tpu_custom_call.1} parent=11 // pred_fallthru
          _
        // Predicated region
        $region45: #{tpu_custom_call.1} parent=11 // pred_check
          %p399 = pneg %p242
        $region46: #{tpu_custom_call.1} parent=11 // pred_check_branch
          %401 = sbr.rel (%p399) target = $region48
        $region47: #{tpu_custom_call.1} parent=11 // pred_region
          _
        $region48: #{tpu_custom_call.1} parent=11 // pred_fallthru
          _
        // Predicated region
        $region49: #{tpu_custom_call.1} parent=11 // pred_check
          %p402 = pneg %p263
        $region50: #{tpu_custom_call.1} parent=11 // pred_check_branch
          %404 = sbr.rel (%p402) target = $region52
        $region51: #{tpu_custom_call.1} parent=11 // pred_region
          _
        $region52: #{tpu_custom_call.1} parent=11 // pred_fallthru
          _
        // Predicated region
        $region53: #{tpu_custom_call.1} parent=11 // pred_check
          %p405 = pneg %p284
        $region54: #{tpu_custom_call.1} parent=11 // pred_check_branch
          %407 = sbr.rel (%p405) target = $region56
        $region55: #{tpu_custom_call.1} parent=11 // pred_region
          _
        $region56: #{tpu_custom_call.1} parent=11 // pred_fallthru
          _
        // Predicated region
        $region57: #{tpu_custom_call.1} parent=11 // pred_check
          %p408 = pneg %p305
        $region58: #{tpu_custom_call.1} parent=11 // pred_check_branch
          %410 = sbr.rel (%p408) target = $region60
        $region59: #{tpu_custom_call.1} parent=11 // pred_region
          _
        $region60: #{tpu_custom_call.1} parent=11 // pred_fallthru
          _
      $region12: #{tpu_custom_call.1} parent=5 // pred_fallthru
        _
      %p411 = scmp.lt.s32.totalorder %s27, 2
      // Predicated region
      $region61: #{tpu_custom_call.1} parent=5 // pred_check
        %p412 = pneg %p411
      $region62: #{tpu_custom_call.1} parent=5 // pred_check_branch
        %414 = sbr.rel (%p412) target = $region64
      $region63: #{tpu_custom_call.1} parent=5 // pred_region
        // Predicated region
        $region65: #{tpu_custom_call.1} parent=63 // pred_check
          %p415 = pneg %p47
        $region66: #{tpu_custom_call.1} parent=63 // pred_check_branch
          %417 = sbr.rel (%p415) target = $region68
        $region67: #{tpu_custom_call.1} parent=63 // pred_region
          %s418 = sand.u32 %s37, 1
          %s419 = scalar_lea.sflag [#allocation3], %s418
          %s420 = sand.u32 %s37, 1
          %s421 = smul.addr %s420, 128
          %s422 = scalar_lea.vmem [#allocation2], %s421
          %s423 = smul.u32 8, %s27
          %425 = vsyncadd %s419, 0
          %s426 = smul.addr %s423, 2
          %s427 = smul.addr %s426, 8
          %s428 = scalar_lea.hbm %s0, %s427
          %s429 = sshll.u32 %s428, 4
          %s430 = int_to_ptr.hbm [resolvable:$true] %s429
          %s431 = sshll.u32 %s422, 4
          %s432 = int_to_ptr.vmem [resolvable:$true] %s431
          %437 = dma.hbm_to_vmem [thread:$0]  %s430, 2048, %s432, %s419, 128, 128, 8
        $region68: #{tpu_custom_call.1} parent=63 // pred_fallthru
          _
      $region64: #{tpu_custom_call.1} parent=5 // pred_fallthru
        _
      %p438 = scmp.le.s32.totalorder 1, %s27
      %p439 = scmp.lt.s32.totalorder %s27, 3
      %p440 = pnand %p438, %p439
      %p441 = pneg %p440
      // Predicated region
      $region69: #{tpu_custom_call.1} parent=5 // pred_check
        _
      $region70: #{tpu_custom_call.1} parent=5 // pred_check_branch
        %443 = sbr.rel (%p440) target = $region72
      $region71: #{tpu_custom_call.1} parent=5 // pred_region
        %s444 = ssub.s32 %s27, 1
        %s445 = sand.u32 %s40, 1
        %s446 = scalar_lea.sflag [#allocation3], %s445
        %s447 = sand.u32 %s40, 1
        %s448 = smul.addr %s447, 128
        %s449 = scalar_lea.vmem [#allocation2], %s448
        // Predicated region
        $region73: #{tpu_custom_call.1} parent=71 // pred_check
          %p450 = pneg %p53
        $region74: #{tpu_custom_call.1} parent=71 // pred_check_branch
          %452 = sbr.rel (%p450) target = $region76
        $region75: #{tpu_custom_call.1} parent=71 // pred_region
          %454 = dma.done %s446, 2048
        $region76: #{tpu_custom_call.1} parent=71 // pred_fallthru
          _
        // Predicated region
        $region77: #{tpu_custom_call.1} parent=71 // pred_check
          %p455 = pneg %p74
        $region78: #{tpu_custom_call.1} parent=71 // pred_check_branch
          %457 = sbr.rel (%p455) target = $region80
        $region79: #{tpu_custom_call.1} parent=71 // pred_region
          %459 = dma.done [#allocation6], 16
        $region80: #{tpu_custom_call.1} parent=71 // pred_fallthru
          _
        // Predicated region
        $region81: #{tpu_custom_call.1} parent=71 // pred_check
          %p460 = pneg %p137
        $region82: #{tpu_custom_call.1} parent=71 // pred_check_branch
          %462 = sbr.rel (%p460) target = $region84
        $region83: #{tpu_custom_call.1} parent=71 // pred_region
          %464 = dma.done [#allocation6], 16
        $region84: #{tpu_custom_call.1} parent=71 // pred_fallthru
          _
        // Predicated region
        $region85: #{tpu_custom_call.1} parent=71 // pred_check
          %p465 = pneg %p200
        $region86: #{tpu_custom_call.1} parent=71 // pred_check_branch
          %467 = sbr.rel (%p465) target = $region88
        $region87: #{tpu_custom_call.1} parent=71 // pred_region
          %469 = dma.done [#allocation9], 512
        $region88: #{tpu_custom_call.1} parent=71 // pred_fallthru
          _
        %s470 = sand.u32 %s40, 1
        %s471 = scalar_lea.sflag [#allocation3], %s470
        %s472 = sand.u32 %s40, 1
        %s473 = smul.addr %s472, 128
        %s474 = scalar_lea.vmem [#allocation2], %s473
        %p475 = pneg %p53
        %p476 = pneg %p50
        %p477 = pneg %p74
        %p478 = pneg %p71
        %p479 = pneg %p95
        %p480 = pneg %p92
        %p481 = pneg %p116
        %p482 = pneg %p113
        %p483 = pneg %p137
        %p484 = pneg %p134
        %p485 = pneg %p158
        %p486 = pneg %p155
        %p487 = pneg %p179
        %p488 = pneg %p176
        %p489 = pneg %p200
        %p490 = pneg %p197
        %p491 = pneg %p221
        %p492 = pneg %p218
        %p493 = pneg %p242
        %p494 = pneg %p239
        %p495 = pneg %p263
        %p496 = pneg %p260
        %p497 = pneg %p284
        %p498 = pneg %p281
        %p499 = pneg %p305
        %p500 = pneg %p302
        %p501 = pneg %p331
        %p502 = pneg %p328
        %s503 = sand.u32 %s318, 1
        %s504 = scalar_lea.sflag [#allocation4], %s503
        %s505 = sand.u32 %s318, 1
        %s506 = smul.addr %s505, 8
        %s507 = scalar_lea.vmem [#allocation10], %s506
        %s508 = smul.u32 8, %s32
        %v509 = vld [vmem:[%s449] sm:$0xff]
        %v510 = vld [vmem:[%s449 + $0x8] sm:$0xff]
        %v511 = vld [vmem:[%s449 + $0x10] sm:$0xff]
        %v512 = vld [vmem:[%s449 + $0x18] sm:$0xff]
        %v513 = vld [vmem:[%s449 + $0x20] sm:$0xff]
        %v514 = vld [vmem:[%s449 + $0x28] sm:$0xff]
        %v515 = vld [vmem:[%s449 + $0x30] sm:$0xff]
        %v516 = vld [vmem:[%s449 + $0x38] sm:$0xff]
        %v517 = vld [vmem:[%s449 + $0x40] sm:$0xff]
        %v518 = vld [vmem:[%s449 + $0x48] sm:$0xff]
        %v519 = vld [vmem:[%s449 + $0x50] sm:$0xff]
        %v520 = vld [vmem:[%s449 + $0x58] sm:$0xff]
        %v521 = vld [vmem:[%s449 + $0x60] sm:$0xff]
        %v522 = vld [vmem:[%s449 + $0x68] sm:$0xff]
        %v523 = vld [vmem:[%s449 + $0x70] sm:$0xff]
        %v524 = vld [vmem:[%s449 + $0x78] sm:$0xff]
        %vm525 = vcmask 261120
        %v526 = vsel %vm525, %v509, 0.0
        %v527 = vsel %vm525, %v510, 0.0
        %v528 = vadd.f32 %v526, %v527
        %v529 = vrot.slane %v528, 4
        %v530 = vadd.f32 %v528, %v529
        %v531 = vrot.slane %v530, 2
        %v532 = vadd.f32 %v530, %v531
        %v533 = vrot.slane %v532, 1
        %v534 = vadd.f32 %v532, %v533
        %v535 = vsel %vm525, %v511, 0.0
        %v536 = vsel %vm525, %v512, 0.0
        %v537 = vadd.f32 %v535, %v536
        %v538 = vrot.slane %v537, 4
        %v539 = vadd.f32 %v537, %v538
        %v540 = vrot.slane %v539, 2
        %v541 = vadd.f32 %v539, %v540
        %v542 = vrot.slane %v541, 1
        %v543 = vadd.f32 %v541, %v542
        %v544 = vsel %vm525, %v513, 0.0
        %v545 = vsel %vm525, %v514, 0.0
        %v546 = vadd.f32 %v544, %v545
        %v547 = vrot.slane %v546, 4
        %v548 = vadd.f32 %v546, %v547
        %v549 = vrot.slane %v548, 2
        %v550 = vadd.f32 %v548, %v549
        %v551 = vrot.slane %v550, 1
        %v552 = vadd.f32 %v550, %v551
        %v553 = vsel %vm525, %v515, 0.0
        %v554 = vsel %vm525, %v516, 0.0
        %v555 = vadd.f32 %v553, %v554
        %v556 = vrot.slane %v555, 4
        %v557 = vadd.f32 %v555, %v556
        %v558 = vrot.slane %v557, 2
        %v559 = vadd.f32 %v557, %v558
        %v560 = vrot.slane %v559, 1
        %v561 = vadd.f32 %v559, %v560
        %v562 = vsel %vm525, %v517, 0.0
        %v563 = vsel %vm525, %v518, 0.0
        %v564 = vadd.f32 %v562, %v563
        %v565 = vrot.slane %v564, 4
        %v566 = vadd.f32 %v564, %v565
        %v567 = vrot.slane %v566, 2
        %v568 = vadd.f32 %v566, %v567
        %v569 = vrot.slane %v568, 1
        %v570 = vadd.f32 %v568, %v569
        %v571 = vsel %vm525, %v519, 0.0
        %v572 = vsel %vm525, %v520, 0.0
        %v573 = vadd.f32 %v571, %v572
        %v574 = vrot.slane %v573, 4
        %v575 = vadd.f32 %v573, %v574
        %v576 = vrot.slane %v575, 2
        %v577 = vadd.f32 %v575, %v576
        %v578 = vrot.slane %v577, 1
        %v579 = vadd.f32 %v577, %v578
        %v580 = vsel %vm525, %v521, 0.0
        %v581 = vsel %vm525, %v522, 0.0
        %v582 = vadd.f32 %v580, %v581
        %v583 = vrot.slane %v582, 4
        %v584 = vadd.f32 %v582, %v583
        %v585 = vrot.slane %v584, 2
        %v586 = vadd.f32 %v584, %v585
        %v587 = vrot.slane %v586, 1
        %v588 = vadd.f32 %v586, %v587
        %v589 = vsel %vm525, %v523, 0.0
        %v590 = vsel %vm525, %v524, 0.0
        %v591 = vadd.f32 %v589, %v590
        %v592 = vrot.slane %v591, 4
        %v593 = vadd.f32 %v591, %v592
        %v594 = vrot.slane %v593, 2
        %v595 = vadd.f32 %v593, %v594
        %v596 = vrot.slane %v595, 1
        %v597 = vadd.f32 %v595, %v596
        %v598 = vmul.f32 %v534, 0.0625
        %v599 = vmul.f32 %v543, 0.0625
        %v600 = vmul.f32 %v552, 0.0625
        %v601 = vmul.f32 %v561, 0.0625
        %v602 = vmul.f32 %v570, 0.0625
        %v603 = vmul.f32 %v579, 0.0625
        %v604 = vmul.f32 %v588, 0.0625
        %v605 = vmul.f32 %v597, 0.0625
        %v606 = vld [vmem:[#allocation5] sm:$0x1]
        %v608 = vperm.slane %v606, 0
        %v610 = vadd.f32 %v598, %v608
        %v611 = vadd.f32 %v599, %v608
        %v612 = vadd.f32 %v600, %v608
        %v613 = vadd.f32 %v601, %v608
        %v614 = vadd.f32 %v602, %v608
        %v615 = vadd.f32 %v603, %v608
        %v616 = vadd.f32 %v604, %v608
        %v617 = vadd.f32 %v605, %v608
        %v618 = vld [vmem:[%s2] sm:$0xff]
        %v619 = vld [vmem:[%s2 + $0x8] sm:$0xff]
        %v620 = vadd.f32 %v509, %v618
        %v621 = vadd.f32 %v510, %v619
        %v622 = vadd.f32 %v511, %v618
        %v623 = vadd.f32 %v512, %v619
        %v624 = vadd.f32 %v513, %v618
        %v625 = vadd.f32 %v514, %v619
        %v626 = vadd.f32 %v515, %v618
        %v627 = vadd.f32 %v516, %v619
        %v628 = vadd.f32 %v517, %v618
        %v629 = vadd.f32 %v518, %v619
        %v630 = vadd.f32 %v519, %v618
        %v631 = vadd.f32 %v520, %v619
        %v632 = vadd.f32 %v521, %v618
        %v633 = vadd.f32 %v522, %v619
        %v634 = vadd.f32 %v523, %v618
        %v635 = vadd.f32 %v524, %v619
        %v636 = vld [vmem:[%s3] sm:$0xff]
        %v637 = vld [vmem:[%s3 + $0x8] sm:$0xff]
        %v638 = vld [vmem:[%s3 + $0x10] sm:$0xff]
        %v639 = vld [vmem:[%s3 + $0x18] sm:$0xff]
        %v640 = vld [vmem:[%s5] sm:$0xff]
        %v641 = vld [vmem:[%s5 + $0x8] sm:$0xff]
        %v642 = vld [vmem:[%s5 + $0x10] sm:$0xff]
        %v643 = vld [vmem:[%s5 + $0x18] sm:$0xff]
        %v644 = vld [vmem:[#allocation8] sm:$0xff]
        %v645 = vld [vmem:[#allocation8 + $0x8] sm:$0xff]
        %v646 = vld [vmem:[#allocation8 + $0x10] sm:$0xff]
        %v647 = vld [vmem:[#allocation8 + $0x18] sm:$0xff]
        %v648 = vld [vmem:[#allocation7] sm:$0x1]
        %v650 = vperm.slane %v648, 0
        %v660 = vrot.slane %v611, 7
        %vm661 = vcmask 1041409
        %v662 = vsel %vm661, %v660, %v610
        %v663 = vrot.slane %v612, 6
        %vm664 = vcmask 1042434
        %v665 = vsel %vm664, %v663, %v662
        %v666 = vrot.slane %v613, 5
        %vm667 = vcmask 1043459
        %v668 = vsel %vm667, %v666, %v665
        %v669 = vrot.slane %v614, 4
        %vm670 = vcmask 1044484
        %v671 = vsel %vm670, %v669, %v668
        %v672 = vrot.slane %v615, 3
        %vm673 = vcmask 1045509
        %v674 = vsel %vm673, %v672, %v671
        %v675 = vrot.slane %v616, 2
        %vm676 = vcmask 1046534
        %v677 = vsel %vm676, %v675, %v674
        %v678 = vrot.slane %v617, 1
        %vm679 = vcmask 1047559
        %v680 = vsel %vm679, %v678, %v677
        %v681 = vsel %vm525, %v680, 0
        %683 = vmatpush.msra.mxu0 0.0
        %684 = vmatpush.msra.mxu0 0.0
        %685 = vmatpush.msra.mxu0 0.0
        %686 = vmatpush.msra.mxu0 0.0
        %687 = vmatpush.msra.mxu0 0.0
        %688 = vmatpush.msra.mxu0 0.0
        %689 = vmatpush.msra.mxu0 0.0
        %690 = vmatpush.msra.mxu0 0.0
        %691 = vmatpush.msra.mxu0 0.0
        %692 = vmatpush.msra.mxu0 0.0
        %693 = vmatpush.msra.mxu0 0.0
        %694 = vmatpush.msra.mxu0 0.0
        %695 = vmatpush.msra.mxu0 %v639
        %696 = vmatpush.msra.mxu0 %v638
        %697 = vmatpush.msra.mxu0 %v637
        %698 = vmatpush.msra.mxu0 %v636
        %699 = vmatmul.f32.gmra.mxu0 %v681
        %v700 = vpop.f32.mrf.mxu0
        %v701 = vadd.f32 %v650, %v700
        %702 = vdwg.mxu0
        %v703 = vmul.f32 %v701, 0.35355338
        %v704 = vld [vmem:[%s6] sm:$0x1]
        %v706 = vperm.slane %v704, 0
        %708 = vmatpush.msra.mxu0 0.0
        %709 = vmatpush.msra.mxu0 0.0
        %710 = vmatpush.msra.mxu0 0.0
        %711 = vmatpush.msra.mxu0 0.0
        %712 = vmatpush.msra.mxu0 0.0
        %713 = vmatpush.msra.mxu0 0.0
        %714 = vmatpush.msra.mxu0 0.0
        %715 = vmatpush.msra.mxu0 0.0
        %716 = vmatpush.msra.mxu0 0.0
        %717 = vmatpush.msra.mxu0 0.0
        %718 = vmatpush.msra.mxu0 0.0
        %719 = vmatpush.msra.mxu0 0.0
        %720 = vmatpush.msra.mxu0 %v643
        %721 = vmatpush.msra.mxu0 %v642
        %722 = vmatpush.msra.mxu0 %v641
        %723 = vmatpush.msra.mxu0 %v640
        %724 = vmatmul.f32.gmra.mxu0 %v681
        %v725 = vpop.f32.mrf.mxu0
        %v726 = vadd.f32 %v706, %v725
        %727 = vdwg.mxu0
        %v728 = vld [vmem:[%s8] sm:$0x1]
        %v730 = vperm.slane %v728, 0
        %732 = vmatpush.msra.mxu0 0.0
        %733 = vmatpush.msra.mxu0 0.0
        %734 = vmatpush.msra.mxu0 0.0
        %735 = vmatpush.msra.mxu0 0.0
        %736 = vmatpush.msra.mxu0 0.0
        %737 = vmatpush.msra.mxu0 0.0
        %738 = vmatpush.msra.mxu0 0.0
        %739 = vmatpush.msra.mxu0 0.0
        %740 = vmatpush.msra.mxu0 0.0
        %741 = vmatpush.msra.mxu0 0.0
        %742 = vmatpush.msra.mxu0 0.0
        %743 = vmatpush.msra.mxu0 0.0
        %744 = vmatpush.msra.mxu0 %v647
        %745 = vmatpush.msra.mxu0 %v646
        %746 = vmatpush.msra.mxu0 %v645
        %747 = vmatpush.msra.mxu0 %v644
        %748 = vmatmul.f32.gmra.mxu0 %v681
        %v749 = vpop.f32.mrf.mxu0
        %v750 = vadd.f32 %v730, %v749
        %751 = vdwg.mxu0
        %v753 = vsel %vm525, %v620, 0
        %v756 = vsel %vm525, %v621, 0
        %v759 = vsel %vm525, %v622, 0
        %v762 = vsel %vm525, %v623, 0
        %v765 = vsel %vm525, %v624, 0
        %v768 = vsel %vm525, %v625, 0
        %v771 = vsel %vm525, %v626, 0
        %v774 = vsel %vm525, %v627, 0
        %v777 = vsel %vm525, %v628, 0
        %v780 = vsel %vm525, %v629, 0
        %v783 = vsel %vm525, %v630, 0
        %v786 = vsel %vm525, %v631, 0
        %v789 = vsel %vm525, %v632, 0
        %v792 = vsel %vm525, %v633, 0
        %v795 = vsel %vm525, %v634, 0
        %v798 = vsel %vm525, %v635, 0
        %800 = vmatpush.msra.mxu0 0.0
        %801 = vmatpush.msra.mxu0 0.0
        %802 = vmatpush.msra.mxu0 0.0
        %803 = vmatpush.msra.mxu0 0.0
        %804 = vmatpush.msra.mxu0 0.0
        %805 = vmatpush.msra.mxu0 0.0
        %806 = vmatpush.msra.mxu0 0.0
        %807 = vmatpush.msra.mxu0 0.0
        %808 = vmatpush.msra.mxu0 0.0
        %809 = vmatpush.msra.mxu0 0.0
        %810 = vmatpush.msra.mxu0 0.0
        %811 = vmatpush.msra.mxu0 0.0
        %812 = vmatpush.msra.mxu0 %v643
        %813 = vmatpush.msra.mxu0 %v642
        %814 = vmatpush.msra.mxu0 %v641
        %815 = vmatpush.msra.mxu0 %v640
        %816 = vmatmul.f32.gmra.mxu0 %v753
        %v817 = vpop.f32.mrf.mxu0
        %v818 = vadd.f32 %v706, %v817
        %819 = vmatmul.f32.gmra.mxu0 %v756
        %v820 = vpop.f32.mrf.mxu0
        %v821 = vadd.f32 %v706, %v820
        %822 = vmatmul.f32.gmra.mxu0 %v759
        %v823 = vpop.f32.mrf.mxu0
        %v824 = vadd.f32 %v706, %v823
        %825 = vmatmul.f32.gmra.mxu0 %v762
        %v826 = vpop.f32.mrf.mxu0
        %v827 = vadd.f32 %v706, %v826
        %828 = vmatmul.f32.gmra.mxu0 %v765
        %v829 = vpop.f32.mrf.mxu0
        %v830 = vadd.f32 %v706, %v829
        %831 = vmatmul.f32.gmra.mxu0 %v768
        %v832 = vpop.f32.mrf.mxu0
        %v833 = vadd.f32 %v706, %v832
        %834 = vmatmul.f32.gmra.mxu0 %v771
        %v835 = vpop.f32.mrf.mxu0
        %v836 = vadd.f32 %v706, %v835
        %837 = vmatmul.f32.gmra.mxu0 %v774
        %v838 = vpop.f32.mrf.mxu0
        %v839 = vadd.f32 %v706, %v838
        %840 = vmatmul.f32.gmra.mxu0 %v777
        %v841 = vpop.f32.mrf.mxu0
        %v842 = vadd.f32 %v706, %v841
        %843 = vmatmul.f32.gmra.mxu0 %v780
        %v844 = vpop.f32.mrf.mxu0
        %v845 = vadd.f32 %v706, %v844
        %846 = vmatmul.f32.gmra.mxu0 %v783
        %v847 = vpop.f32.mrf.mxu0
        %v848 = vadd.f32 %v706, %v847
        %849 = vmatmul.f32.gmra.mxu0 %v786
        %v850 = vpop.f32.mrf.mxu0
        %v851 = vadd.f32 %v706, %v850
        %852 = vmatmul.f32.gmra.mxu0 %v789
        %v853 = vpop.f32.mrf.mxu0
        %v854 = vadd.f32 %v706, %v853
        %855 = vmatmul.f32.gmra.mxu0 %v792
        %v856 = vpop.f32.mrf.mxu0
        %v857 = vadd.f32 %v706, %v856
        %858 = vmatmul.f32.gmra.mxu0 %v795
        %v859 = vpop.f32.mrf.mxu0
        %v860 = vadd.f32 %v706, %v859
        %861 = vmatmul.f32.gmra.mxu0 %v798
        %v862 = vpop.f32.mrf.mxu0
        %v863 = vadd.f32 %v706, %v862
        %864 = vdwg.mxu0
        %865 = vmatpush.msra.mxu0 0.0
        %866 = vmatpush.msra.mxu0 0.0
        %867 = vmatpush.msra.mxu0 0.0
        %868 = vmatpush.msra.mxu0 0.0
        %869 = vmatpush.msra.mxu0 0.0
        %870 = vmatpush.msra.mxu0 0.0
        %871 = vmatpush.msra.mxu0 0.0
        %872 = vmatpush.msra.mxu0 0.0
        %873 = vmatpush.msra.mxu0 0.0
        %874 = vmatpush.msra.mxu0 0.0
        %875 = vmatpush.msra.mxu0 0.0
        %876 = vmatpush.msra.mxu0 0.0
        %877 = vmatpush.msra.mxu0 %v647
        %878 = vmatpush.msra.mxu0 %v646
        %879 = vmatpush.msra.mxu0 %v645
        %880 = vmatpush.msra.mxu0 %v644
        %881 = vmatmul.f32.gmra.mxu0 %v753
        %v882 = vpop.f32.mrf.mxu0
        %v883 = vadd.f32 %v730, %v882
        %884 = vmatmul.f32.gmra.mxu0 %v756
        %v885 = vpop.f32.mrf.mxu0
        %v886 = vadd.f32 %v730, %v885
        %887 = vmatmul.f32.gmra.mxu0 %v759
        %v888 = vpop.f32.mrf.mxu0
        %v889 = vadd.f32 %v730, %v888
        %890 = vmatmul.f32.gmra.mxu0 %v762
        %v891 = vpop.f32.mrf.mxu0
        %v892 = vadd.f32 %v730, %v891
        %893 = vmatmul.f32.gmra.mxu0 %v765
        %v894 = vpop.f32.mrf.mxu0
        %v895 = vadd.f32 %v730, %v894
        %896 = vmatmul.f32.gmra.mxu0 %v768
        %v897 = vpop.f32.mrf.mxu0
        %v898 = vadd.f32 %v730, %v897
        %899 = vmatmul.f32.gmra.mxu0 %v771
        %v900 = vpop.f32.mrf.mxu0
        %v901 = vadd.f32 %v730, %v900
        %902 = vmatmul.f32.gmra.mxu0 %v774
        %v903 = vpop.f32.mrf.mxu0
        %v904 = vadd.f32 %v730, %v903
        %905 = vmatmul.f32.gmra.mxu0 %v777
        %v906 = vpop.f32.mrf.mxu0
        %v907 = vadd.f32 %v730, %v906
        %908 = vmatmul.f32.gmra.mxu0 %v780
        %v909 = vpop.f32.mrf.mxu0
        %v910 = vadd.f32 %v730, %v909
        %911 = vmatmul.f32.gmra.mxu0 %v783
        %v912 = vpop.f32.mrf.mxu0
        %v913 = vadd.f32 %v730, %v912
        %914 = vmatmul.f32.gmra.mxu0 %v786
        %v915 = vpop.f32.mrf.mxu0
        %v916 = vadd.f32 %v730, %v915
        %917 = vmatmul.f32.gmra.mxu0 %v789
        %v918 = vpop.f32.mrf.mxu0
        %v919 = vadd.f32 %v730, %v918
        %920 = vmatmul.f32.gmra.mxu0 %v792
        %v921 = vpop.f32.mrf.mxu0
        %v922 = vadd.f32 %v730, %v921
        %923 = vmatmul.f32.gmra.mxu0 %v795
        %v924 = vpop.f32.mrf.mxu0
        %v925 = vadd.f32 %v730, %v924
        %926 = vmatmul.f32.gmra.mxu0 %v798
        %v927 = vpop.f32.mrf.mxu0
        %v928 = vadd.f32 %v730, %v927
        %929 = vdwg.mxu0
        %v930 = vld [vmem:[%s11] sm:$0xff]
        %v931 = vld [vmem:[%s11 + $0x8] sm:$0xff]
        %v932 = vld [vmem:[%s11 + $0x10] sm:$0xff]
        %v933 = vld [vmem:[%s11 + $0x18] sm:$0xff]
        %v935 = vrot.slane %v703, 1
        %v936 = vrot.slane %v703, 2
        %v937 = vrot.slane %v703, 3
        %v938 = vrot.slane %v703, 4
        %v939 = vrot.slane %v703, 5
        %v940 = vrot.slane %v703, 6
        %v941 = vrot.slane %v703, 7
        %v942 = vperm.slane %v703, 0
        %v943 = vperm.slane %v935, 0
        %v944 = vperm.slane %v936, 0
        %v945 = vperm.slane %v937, 0
        %v946 = vperm.slane %v938, 0
        %v947 = vperm.slane %v939, 0
        %v948 = vperm.slane %v940, 0
        %v949 = vperm.slane %v941, 0
        %v958 = vmul.f32 %v818, %v942
        %v959 = vmul.f32 %v821, %v942
        %v960 = vmul.f32 %v824, %v943
        %v961 = vmul.f32 %v827, %v943
        %v962 = vmul.f32 %v830, %v944
        %v963 = vmul.f32 %v833, %v944
        %v964 = vmul.f32 %v836, %v945
        %v965 = vmul.f32 %v839, %v945
        %v966 = vmul.f32 %v842, %v946
        %v967 = vmul.f32 %v845, %v946
        %v968 = vmul.f32 %v848, %v947
        %v969 = vmul.f32 %v851, %v947
        %v970 = vmul.f32 %v854, %v948
        %v971 = vmul.f32 %v857, %v948
        %v972 = vmul.f32 %v860, %v949
        %v973 = vmul.f32 %v863, %v949
        %v975 = vsel %vm525, %v958, 0
        %v978 = vsel %vm525, %v959, 0
        %v981 = vsel %vm525, %v960, 0
        %v984 = vsel %vm525, %v961, 0
        %v987 = vsel %vm525, %v962, 0
        %v990 = vsel %vm525, %v963, 0
        %v993 = vsel %vm525, %v964, 0
        %v996 = vsel %vm525, %v965, 0
        %v999 = vsel %vm525, %v966, 0
        %v1002 = vsel %vm525, %v967, 0
        %v1005 = vsel %vm525, %v968, 0
        %v1008 = vsel %vm525, %v969, 0
        %v1011 = vsel %vm525, %v970, 0
        %v1014 = vsel %vm525, %v971, 0
        %v1017 = vsel %vm525, %v972, 0
        %v1020 = vsel %vm525, %v973, 0
        %1022 = vmatpush.msra.mxu0 0.0
        %1023 = vmatpush.msra.mxu0 0.0
        %1024 = vmatpush.msra.mxu0 0.0
        %1025 = vmatpush.msra.mxu0 0.0
        %1026 = vmatpush.msra.mxu0 0.0
        %1027 = vmatpush.msra.mxu0 0.0
        %1028 = vmatpush.msra.mxu0 0.0
        %1029 = vmatpush.msra.mxu0 0.0
        %1030 = vmatpush.msra.mxu0 0.0
        %1031 = vmatpush.msra.mxu0 0.0
        %1032 = vmatpush.msra.mxu0 0.0
        %1033 = vmatpush.msra.mxu0 0.0
        %1034 = vmatpush.msra.mxu0 %v933
        %1035 = vmatpush.msra.mxu0 %v932
        %1036 = vmatpush.msra.mxu0 %v931
        %1037 = vmatpush.msra.mxu0 %v930
        %1038 = vmatmul.f32.gmra.mxu0 %v975
        %v1039 = vpop.f32.mrf.mxu0
        %v1040 = vadd.f32 0.0, %v1039
        %1041 = vmatmul.f32.gmra.mxu0 %v978
        %v1042 = vpop.f32.mrf.mxu0
        %v1043 = vadd.f32 0.0, %v1042
        %1044 = vmatmul.f32.gmra.mxu0 %v981
        %v1045 = vpop.f32.mrf.mxu0
        %v1046 = vadd.f32 0.0, %v1045
        %1047 = vmatmul.f32.gmra.mxu0 %v984
        %v1048 = vpop.f32.mrf.mxu0
        %v1049 = vadd.f32 0.0, %v1048
        %1050 = vmatmul.f32.gmra.mxu0 %v987
        %v1051 = vpop.f32.mrf.mxu0
        %v1052 = vadd.f32 0.0, %v1051
        %1053 = vmatmul.f32.gmra.mxu0 %v990
        %v1054 = vpop.f32.mrf.mxu0
        %v1055 = vadd.f32 0.0, %v1054
        %1056 = vmatmul.f32.gmra.mxu0 %v993
        %v1057 = vpop.f32.mrf.mxu0
        %v1058 = vadd.f32 0.0, %v1057
        %1059 = vmatmul.f32.gmra.mxu0 %v996
        %v1060 = vpop.f32.mrf.mxu0
        %v1061 = vadd.f32 0.0, %v1060
        %1062 = vmatmul.f32.gmra.mxu0 %v999
        %v1063 = vpop.f32.mrf.mxu0
        %v1064 = vadd.f32 0.0, %v1063
        %1065 = vmatmul.f32.gmra.mxu0 %v1002
        %v1066 = vpop.f32.mrf.mxu0
        %v1067 = vadd.f32 0.0, %v1066
        %1068 = vmatmul.f32.gmra.mxu0 %v1005
        %v1069 = vpop.f32.mrf.mxu0
        %v1070 = vadd.f32 0.0, %v1069
        %1071 = vmatmul.f32.gmra.mxu0 %v1008
        %v1072 = vpop.f32.mrf.mxu0
        %v1073 = vadd.f32 0.0, %v1072
        %1074 = vmatmul.f32.gmra.mxu0 %v1011
        %v1075 = vpop.f32.mrf.mxu0
        %v1076 = vadd.f32 0.0, %v1075
        %1077 = vmatmul.f32.gmra.mxu0 %v1014
        %v1078 = vpop.f32.mrf.mxu0
        %v1079 = vadd.f32 0.0, %v1078
        %1080 = vmatmul.f32.gmra.mxu0 %v1017
        %v1081 = vpop.f32.mrf.mxu0
        %v1082 = vadd.f32 0.0, %v1081
        %1083 = vmatmul.f32.gmra.mxu0 %v1020
        %v1084 = vpop.f32.mrf.mxu0
        %v1085 = vadd.f32 0.0, %v1084
        %1086 = vdwg.mxu0
        %v1087 = vmul.f32 %v726, %v703
        %v1089 = vsel %vm525, %v1087, 0
        %1091 = vmatpush.msra.mxu0 0.0
        %1092 = vmatpush.msra.mxu0 0.0
        %1093 = vmatpush.msra.mxu0 0.0
        %1094 = vmatpush.msra.mxu0 0.0
        %1095 = vmatpush.msra.mxu0 0.0
        %1096 = vmatpush.msra.mxu0 0.0
        %1097 = vmatpush.msra.mxu0 0.0
        %1098 = vmatpush.msra.mxu0 0.0
        %1099 = vmatpush.msra.mxu0 0.0
        %1100 = vmatpush.msra.mxu0 0.0
        %1101 = vmatpush.msra.mxu0 0.0
        %1102 = vmatpush.msra.mxu0 0.0
        %1103 = vmatpush.msra.mxu0 %v933
        %1104 = vmatpush.msra.mxu0 %v932
        %1105 = vmatpush.msra.mxu0 %v931
        %1106 = vmatpush.msra.mxu0 %v930
        %1107 = vmatmul.f32.gmra.mxu0 %v1089
        %v1108 = vpop.f32.mrf.mxu0
        %v1109 = vadd.f32 0.0, %v1108
        %1110 = vdwg.mxu0
        %vm1111 = vcmask 31744
        %v1112 = vsel %vm1111, %v1040, -inf
        %v1113 = vsel %vm1111, %v1043, -inf
        %v1114 = vmax.f32 %v1112, %v1113
        %v1115 = vrot.slane %v1114, 4
        %v1116 = vmax.f32 %v1114, %v1115
        %v1117 = vrot.slane %v1116, 2
        %v1118 = vmax.f32 %v1116, %v1117
        %v1119 = vrot.slane %v1118, 1
        %v1120 = vmax.f32 %v1118, %v1119
        %v1121 = vsel %vm1111, %v1046, -inf
        %v1122 = vsel %vm1111, %v1049, -inf
        %v1123 = vmax.f32 %v1121, %v1122
        %v1124 = vrot.slane %v1123, 4
        %v1125 = vmax.f32 %v1123, %v1124
        %v1126 = vrot.slane %v1125, 2
        %v1127 = vmax.f32 %v1125, %v1126
        %v1128 = vrot.slane %v1127, 1
        %v1129 = vmax.f32 %v1127, %v1128
        %v1130 = vsel %vm1111, %v1052, -inf
        %v1131 = vsel %vm1111, %v1055, -inf
        %v1132 = vmax.f32 %v1130, %v1131
        %v1133 = vrot.slane %v1132, 4
        %v1134 = vmax.f32 %v1132, %v1133
        %v1135 = vrot.slane %v1134, 2
        %v1136 = vmax.f32 %v1134, %v1135
        %v1137 = vrot.slane %v1136, 1
        %v1138 = vmax.f32 %v1136, %v1137
        %v1139 = vsel %vm1111, %v1058, -inf
        %v1140 = vsel %vm1111, %v1061, -inf
        %v1141 = vmax.f32 %v1139, %v1140
        %v1142 = vrot.slane %v1141, 4
        %v1143 = vmax.f32 %v1141, %v1142
        %v1144 = vrot.slane %v1143, 2
        %v1145 = vmax.f32 %v1143, %v1144
        %v1146 = vrot.slane %v1145, 1
        %v1147 = vmax.f32 %v1145, %v1146
        %v1148 = vsel %vm1111, %v1064, -inf
        %v1149 = vsel %vm1111, %v1067, -inf
        %v1150 = vmax.f32 %v1148, %v1149
        %v1151 = vrot.slane %v1150, 4
        %v1152 = vmax.f32 %v1150, %v1151
        %v1153 = vrot.slane %v1152, 2
        %v1154 = vmax.f32 %v1152, %v1153
        %v1155 = vrot.slane %v1154, 1
        %v1156 = vmax.f32 %v1154, %v1155
        %v1157 = vsel %vm1111, %v1070, -inf
        %v1158 = vsel %vm1111, %v1073, -inf
        %v1159 = vmax.f32 %v1157, %v1158
        %v1160 = vrot.slane %v1159, 4
        %v1161 = vmax.f32 %v1159, %v1160
        %v1162 = vrot.slane %v1161, 2
        %v1163 = vmax.f32 %v1161, %v1162
        %v1164 = vrot.slane %v1163, 1
        %v1165 = vmax.f32 %v1163, %v1164
        %v1166 = vsel %vm1111, %v1076, -inf
        %v1167 = vsel %vm1111, %v1079, -inf
        %v1168 = vmax.f32 %v1166, %v1167
        %v1169 = vrot.slane %v1168, 4
        %v1170 = vmax.f32 %v1168, %v1169
        %v1171 = vrot.slane %v1170, 2
        %v1172 = vmax.f32 %v1170, %v1171
        %v1173 = vrot.slane %v1172, 1
        %v1174 = vmax.f32 %v1172, %v1173
        %v1175 = vsel %vm1111, %v1082, -inf
        %v1176 = vsel %vm1111, %v1085, -inf
        %v1177 = vmax.f32 %v1175, %v1176
        %v1178 = vrot.slane %v1177, 4
        %v1179 = vmax.f32 %v1177, %v1178
        %v1180 = vrot.slane %v1179, 2
        %v1181 = vmax.f32 %v1179, %v1180
        %v1182 = vrot.slane %v1181, 1
        %v1183 = vmax.f32 %v1181, %v1182
        %v1185 = vrot.slane %v1109, 1
        %v1186 = vrot.slane %v1109, 2
        %v1187 = vrot.slane %v1109, 3
        %v1188 = vrot.slane %v1109, 4
        %v1189 = vrot.slane %v1109, 5
        %v1190 = vrot.slane %v1109, 6
        %v1191 = vrot.slane %v1109, 7
        %v1200 = vmax.f32 %v1120, %v1109
        %v1201 = vmax.f32 %v1129, %v1185
        %v1202 = vmax.f32 %v1138, %v1186
        %v1203 = vmax.f32 %v1147, %v1187
        %v1204 = vmax.f32 %v1156, %v1188
        %v1205 = vmax.f32 %v1165, %v1189
        %v1206 = vmax.f32 %v1174, %v1190
        %v1207 = vmax.f32 %v1183, %v1191
        %v1208 = vperm.slane %v1200, 0
        %v1209 = vperm.slane %v1201, 0
        %v1210 = vperm.slane %v1202, 0
        %v1211 = vperm.slane %v1203, 0
        %v1212 = vperm.slane %v1204, 0
        %v1213 = vperm.slane %v1205, 0
        %v1214 = vperm.slane %v1206, 0
        %v1215 = vperm.slane %v1207, 0
        %v1216 = vsub.f32 %v1040, %v1208
        %v1217 = vsub.f32 %v1043, %v1208
        %v1218 = vsub.f32 %v1046, %v1209
        %v1219 = vsub.f32 %v1049, %v1209
        %v1220 = vsub.f32 %v1052, %v1210
        %v1221 = vsub.f32 %v1055, %v1210
        %v1222 = vsub.f32 %v1058, %v1211
        %v1223 = vsub.f32 %v1061, %v1211
        %v1224 = vsub.f32 %v1064, %v1212
        %v1225 = vsub.f32 %v1067, %v1212
        %v1226 = vsub.f32 %v1070, %v1213
        %v1227 = vsub.f32 %v1073, %v1213
        %v1228 = vsub.f32 %v1076, %v1214
        %v1229 = vsub.f32 %v1079, %v1214
        %v1230 = vsub.f32 %v1082, %v1215
        %v1231 = vsub.f32 %v1085, %v1215
        %v1232 = vmul.f32 %v1216, 1.442695
        %v1233 = vpow.pop %v1232
        %v1234 = vmul.f32 %v1217, 1.442695
        %v1235 = vpow.pop %v1234
        %v1236 = vmul.f32 %v1218, 1.442695
        %v1237 = vpow.pop %v1236
        %v1238 = vmul.f32 %v1219, 1.442695
        %v1239 = vpow.pop %v1238
        %v1240 = vmul.f32 %v1220, 1.442695
        %v1241 = vpow.pop %v1240
        %v1242 = vmul.f32 %v1221, 1.442695
        %v1243 = vpow.pop %v1242
        %v1244 = vmul.f32 %v1222, 1.442695
        %v1245 = vpow.pop %v1244
        %v1246 = vmul.f32 %v1223, 1.442695
        %v1247 = vpow.pop %v1246
        %v1248 = vmul.f32 %v1224, 1.442695
        %v1249 = vpow.pop %v1248
        %v1250 = vmul.f32 %v1225, 1.442695
        %v1251 = vpow.pop %v1250
        %v1252 = vmul.f32 %v1226, 1.442695
        %v1253 = vpow.pop %v1252
        %v1254 = vmul.f32 %v1227, 1.442695
        %v1255 = vpow.pop %v1254
        %v1256 = vmul.f32 %v1228, 1.442695
        %v1257 = vpow.pop %v1256
        %v1258 = vmul.f32 %v1229, 1.442695
        %v1259 = vpow.pop %v1258
        %v1260 = vmul.f32 %v1230, 1.442695
        %v1261 = vpow.pop %v1260
        %v1262 = vmul.f32 %v1231, 1.442695
        %v1263 = vpow.pop %v1262
        %v1272 = vrot.slane %v1201, 7
        %v1273 = vsel %vm661, %v1272, %v1200
        %v1274 = vrot.slane %v1202, 6
        %v1275 = vsel %vm664, %v1274, %v1273
        %v1276 = vrot.slane %v1203, 5
        %v1277 = vsel %vm667, %v1276, %v1275
        %v1278 = vrot.slane %v1204, 4
        %v1279 = vsel %vm670, %v1278, %v1277
        %v1280 = vrot.slane %v1205, 3
        %v1281 = vsel %vm673, %v1280, %v1279
        %v1282 = vrot.slane %v1206, 2
        %v1283 = vsel %vm676, %v1282, %v1281
        %v1284 = vrot.slane %v1207, 1
        %v1285 = vsel %vm679, %v1284, %v1283
        %v1287 = vsub.f32 %v1109, %v1285
        %v1288 = vmul.f32 %v1287, 1.442695
        %v1289 = vpow.pop %v1288
        %v1290 = vsel %vm1111, %v1233, 0.0
        %v1291 = vsel %vm1111, %v1235, 0.0
        %v1292 = vadd.f32 %v1290, %v1291
        %v1293 = vrot.slane %v1292, 4
        %v1294 = vadd.f32 %v1292, %v1293
        %v1295 = vrot.slane %v1294, 2
        %v1296 = vadd.f32 %v1294, %v1295
        %v1297 = vrot.slane %v1296, 1
        %v1298 = vadd.f32 %v1296, %v1297
        %v1299 = vsel %vm1111, %v1237, 0.0
        %v1300 = vsel %vm1111, %v1239, 0.0
        %v1301 = vadd.f32 %v1299, %v1300
        %v1302 = vrot.slane %v1301, 4
        %v1303 = vadd.f32 %v1301, %v1302
        %v1304 = vrot.slane %v1303, 2
        %v1305 = vadd.f32 %v1303, %v1304
        %v1306 = vrot.slane %v1305, 1
        %v1307 = vadd.f32 %v1305, %v1306
        %v1308 = vsel %vm1111, %v1241, 0.0
        %v1309 = vsel %vm1111, %v1243, 0.0
        %v1310 = vadd.f32 %v1308, %v1309
        %v1311 = vrot.slane %v1310, 4
        %v1312 = vadd.f32 %v1310, %v1311
        %v1313 = vrot.slane %v1312, 2
        %v1314 = vadd.f32 %v1312, %v1313
        %v1315 = vrot.slane %v1314, 1
        %v1316 = vadd.f32 %v1314, %v1315
        %v1317 = vsel %vm1111, %v1245, 0.0
        %v1318 = vsel %vm1111, %v1247, 0.0
        %v1319 = vadd.f32 %v1317, %v1318
        %v1320 = vrot.slane %v1319, 4
        %v1321 = vadd.f32 %v1319, %v1320
        %v1322 = vrot.slane %v1321, 2
        %v1323 = vadd.f32 %v1321, %v1322
        %v1324 = vrot.slane %v1323, 1
        %v1325 = vadd.f32 %v1323, %v1324
        %v1326 = vsel %vm1111, %v1249, 0.0
        %v1327 = vsel %vm1111, %v1251, 0.0
        %v1328 = vadd.f32 %v1326, %v1327
        %v1329 = vrot.slane %v1328, 4
        %v1330 = vadd.f32 %v1328, %v1329
        %v1331 = vrot.slane %v1330, 2
        %v1332 = vadd.f32 %v1330, %v1331
        %v1333 = vrot.slane %v1332, 1
        %v1334 = vadd.f32 %v1332, %v1333
        %v1335 = vsel %vm1111, %v1253, 0.0
        %v1336 = vsel %vm1111, %v1255, 0.0
        %v1337 = vadd.f32 %v1335, %v1336
        %v1338 = vrot.slane %v1337, 4
        %v1339 = vadd.f32 %v1337, %v1338
        %v1340 = vrot.slane %v1339, 2
        %v1341 = vadd.f32 %v1339, %v1340
        %v1342 = vrot.slane %v1341, 1
        %v1343 = vadd.f32 %v1341, %v1342
        %v1344 = vsel %vm1111, %v1257, 0.0
        %v1345 = vsel %vm1111, %v1259, 0.0
        %v1346 = vadd.f32 %v1344, %v1345
        %v1347 = vrot.slane %v1346, 4
        %v1348 = vadd.f32 %v1346, %v1347
        %v1349 = vrot.slane %v1348, 2
        %v1350 = vadd.f32 %v1348, %v1349
        %v1351 = vrot.slane %v1350, 1
        %v1352 = vadd.f32 %v1350, %v1351
        %v1353 = vsel %vm1111, %v1261, 0.0
        %v1354 = vsel %vm1111, %v1263, 0.0
        %v1355 = vadd.f32 %v1353, %v1354
        %v1356 = vrot.slane %v1355, 4
        %v1357 = vadd.f32 %v1355, %v1356
        %v1358 = vrot.slane %v1357, 2
        %v1359 = vadd.f32 %v1357, %v1358
        %v1360 = vrot.slane %v1359, 1
        %v1361 = vadd.f32 %v1359, %v1360
        %v1370 = vsel %vm661, %v1307, %v1298
        %v1371 = vsel %vm664, %v1316, %v1370
        %v1372 = vsel %vm667, %v1325, %v1371
        %v1373 = vsel %vm670, %v1334, %v1372
        %v1374 = vsel %vm673, %v1343, %v1373
        %v1375 = vsel %vm676, %v1352, %v1374
        %v1376 = vsel %vm679, %v1361, %v1375
        %v1378 = vadd.f32 %v1289, %v1376
        %v1379 = vrcp.pop %v1378
        %v1380 = vmul.f32 %v1378, %v1379
        %v1381 = vsub.f32 1.0, %v1380
        %v1382 = vmul.f32 %v1379, %v1381
        %v1383 = vadd.f32 %v1379, %v1382
        %vm1384 = vweird.f32 %v1378
        %vm1385 = vweird.f32 %v1379
        %vm1386 = vmor %vm1384, %vm1385
        %v1387 = vsel %vm1386, %v1379, %v1383
        %v1388 = vand.u32 2147483647, %v1378
        %vm1389 = vcmp.eq.f32.partialorder %v1388, 8.507059e+37
        %v1390 = vand.u32 %v1378, 2147483648
        %v1391 = vor.u32 1.1754944e-38, %v1390
        %v1392 = vsel %vm1389, %v1391, %v1387
        %v1393 = vld [vmem:[%s12] sm:$0xf]
        %v1395 = vrot.slane %v1392, 1
        %v1396 = vrot.slane %v1392, 2
        %v1397 = vrot.slane %v1392, 3
        %v1398 = vrot.slane %v1392, 4
        %v1399 = vrot.slane %v1392, 5
        %v1400 = vrot.slane %v1392, 6
        %v1401 = vrot.slane %v1392, 7
        %v1402 = vperm.slane %v1392, 0
        %v1403 = vperm.slane %v1395, 0
        %v1404 = vperm.slane %v1396, 0
        %v1405 = vperm.slane %v1397, 0
        %v1406 = vperm.slane %v1398, 0
        %v1407 = vperm.slane %v1399, 0
        %v1408 = vperm.slane %v1400, 0
        %v1409 = vperm.slane %v1401, 0
        %v1418 = vmul.f32 %v1233, %v1402
        %v1419 = vmul.f32 %v1235, %v1402
        %v1420 = vmul.f32 %v1237, %v1403
        %v1421 = vmul.f32 %v1239, %v1403
        %v1422 = vmul.f32 %v1241, %v1404
        %v1423 = vmul.f32 %v1243, %v1404
        %v1424 = vmul.f32 %v1245, %v1405
        %v1425 = vmul.f32 %v1247, %v1405
        %v1426 = vmul.f32 %v1249, %v1406
        %v1427 = vmul.f32 %v1251, %v1406
        %v1428 = vmul.f32 %v1253, %v1407
        %v1429 = vmul.f32 %v1255, %v1407
        %v1430 = vmul.f32 %v1257, %v1408
        %v1431 = vmul.f32 %v1259, %v1408
        %v1432 = vmul.f32 %v1261, %v1409
        %v1433 = vmul.f32 %v1263, %v1409
        %v1435 = vsel %vm1111, %v1418, 0
        %v1438 = vsel %vm1111, %v1419, 0
        %v1441 = vsel %vm1111, %v1420, 0
        %v1444 = vsel %vm1111, %v1421, 0
        %v1447 = vsel %vm1111, %v1422, 0
        %v1450 = vsel %vm1111, %v1423, 0
        %v1453 = vsel %vm1111, %v1424, 0
        %v1456 = vsel %vm1111, %v1425, 0
        %v1459 = vsel %vm1111, %v1426, 0
        %v1462 = vsel %vm1111, %v1427, 0
        %v1465 = vsel %vm1111, %v1428, 0
        %v1468 = vsel %vm1111, %v1429, 0
        %v1471 = vsel %vm1111, %v1430, 0
        %v1474 = vsel %vm1111, %v1431, 0
        %v1477 = vsel %vm1111, %v1432, 0
        %v1480 = vsel %vm1111, %v1433, 0
        %vm1482 = vcmask 1043456
        %v1484 = vsel %vm1482, %v1393, 0
        %1486 = vmatpush.msra.mxu0 0.0
        %1487 = vmatpush.msra.mxu0 0.0
        %1488 = vmatpush.msra.mxu0 0.0
        %1489 = vmatpush.msra.mxu0 0.0
        %1490 = vmatpush.msra.mxu0 0.0
        %1491 = vmatpush.msra.mxu0 0.0
        %1492 = vmatpush.msra.mxu0 0.0
        %1493 = vmatpush.msra.mxu0 0.0
        %1494 = vmatpush.msra.mxu0 0.0
        %1495 = vmatpush.msra.mxu0 0.0
        %1496 = vmatpush.msra.mxu0 0.0
        %1497 = vmatpush.msra.mxu0 0.0
        %1498 = vmatpush.msra.mxu0 0.0
        %1499 = vmatpush.msra.mxu0 0.0
        %1500 = vmatpush.msra.mxu0 0.0
        %1501 = vmatpush.msra.mxu0 %v1484
        %1502 = vmatmul.f32.gmra.mxu0 %v1435
        %v1503 = vpop.f32.mrf.mxu0
        %v1504 = vadd.f32 0.0, %v1503
        %1505 = vmatmul.f32.gmra.mxu0 %v1438
        %v1506 = vpop.f32.mrf.mxu0
        %v1507 = vadd.f32 0.0, %v1506
        %1508 = vmatmul.f32.gmra.mxu0 %v1441
        %v1509 = vpop.f32.mrf.mxu0
        %v1510 = vadd.f32 0.0, %v1509
        %1511 = vmatmul.f32.gmra.mxu0 %v1444
        %v1512 = vpop.f32.mrf.mxu0
        %v1513 = vadd.f32 0.0, %v1512
        %1514 = vmatmul.f32.gmra.mxu0 %v1447
        %v1515 = vpop.f32.mrf.mxu0
        %v1516 = vadd.f32 0.0, %v1515
        %1517 = vmatmul.f32.gmra.mxu0 %v1450
        %v1518 = vpop.f32.mrf.mxu0
        %v1519 = vadd.f32 0.0, %v1518
        %1520 = vmatmul.f32.gmra.mxu0 %v1453
        %v1521 = vpop.f32.mrf.mxu0
        %v1522 = vadd.f32 0.0, %v1521
        %1523 = vmatmul.f32.gmra.mxu0 %v1456
        %v1524 = vpop.f32.mrf.mxu0
        %v1525 = vadd.f32 0.0, %v1524
        %1526 = vmatmul.f32.gmra.mxu0 %v1459
        %v1527 = vpop.f32.mrf.mxu0
        %v1528 = vadd.f32 0.0, %v1527
        %1529 = vmatmul.f32.gmra.mxu0 %v1462
        %v1530 = vpop.f32.mrf.mxu0
        %v1531 = vadd.f32 0.0, %v1530
        %1532 = vmatmul.f32.gmra.mxu0 %v1465
        %v1533 = vpop.f32.mrf.mxu0
        %v1534 = vadd.f32 0.0, %v1533
        %1535 = vmatmul.f32.gmra.mxu0 %v1468
        %v1536 = vpop.f32.mrf.mxu0
        %v1537 = vadd.f32 0.0, %v1536
        %1538 = vmatmul.f32.gmra.mxu0 %v1471
        %v1539 = vpop.f32.mrf.mxu0
        %v1540 = vadd.f32 0.0, %v1539
        %1541 = vmatmul.f32.gmra.mxu0 %v1474
        %v1542 = vpop.f32.mrf.mxu0
        %v1543 = vadd.f32 0.0, %v1542
        %1544 = vmatmul.f32.gmra.mxu0 %v1477
        %v1545 = vpop.f32.mrf.mxu0
        %v1546 = vadd.f32 0.0, %v1545
        %1547 = vmatmul.f32.gmra.mxu0 %v1480
        %v1548 = vpop.f32.mrf.mxu0
        %v1549 = vadd.f32 0.0, %v1548
        %1550 = vdwg.mxu0
        %v1551 = vmul.f32 %v1289, %v1392
        %v1553 = vsel %vm1111, %v1551, 0
        %1555 = vmatpush.msra.mxu0 0.0
        %1556 = vmatpush.msra.mxu0 0.0
        %1557 = vmatpush.msra.mxu0 0.0
        %1558 = vmatpush.msra.mxu0 0.0
        %1559 = vmatpush.msra.mxu0 0.0
        %1560 = vmatpush.msra.mxu0 0.0
        %1561 = vmatpush.msra.mxu0 0.0
        %1562 = vmatpush.msra.mxu0 0.0
        %1563 = vmatpush.msra.mxu0 0.0
        %1564 = vmatpush.msra.mxu0 0.0
        %1565 = vmatpush.msra.mxu0 0.0
        %1566 = vmatpush.msra.mxu0 0.0
        %1567 = vmatpush.msra.mxu0 0.0
        %1568 = vmatpush.msra.mxu0 0.0
        %1569 = vmatpush.msra.mxu0 0.0
        %1570 = vmatpush.msra.mxu0 %v1484
        %1571 = vmatmul.f32.gmra.mxu0 %v1553
        %v1572 = vpop.f32.mrf.mxu0
        %v1573 = vadd.f32 0.0, %v1572
        %1574 = vdwg.mxu0
        %v1575 = vmul.f32 %v1573, %v750
        %v1576 = vmul.f32 %v1504, %v883
        %v1577 = vmul.f32 %v1507, %v886
        %v1578 = vmul.f32 %v1510, %v889
        %v1579 = vmul.f32 %v1513, %v892
        %v1580 = vmul.f32 %v1516, %v895
        %v1581 = vmul.f32 %v1519, %v898
        %v1582 = vmul.f32 %v1522, %v901
        %v1583 = vmul.f32 %v1525, %v904
        %v1584 = vmul.f32 %v1528, %v907
        %v1585 = vmul.f32 %v1531, %v910
        %v1586 = vmul.f32 %v1534, %v913
        %v1587 = vmul.f32 %v1537, %v916
        %v1588 = vmul.f32 %v1540, %v919
        %v1589 = vmul.f32 %v1543, %v922
        %v1590 = vmul.f32 %v1546, %v925
        %v1591 = vmul.f32 %v1549, %v928
        %v1592 = vsel %vm525, %v1576, 0.0
        %v1593 = vsel %vm525, %v1577, 0.0
        %v1594 = vadd.f32 %v1592, %v1593
        %v1595 = vrot.slane %v1594, 4
        %v1596 = vadd.f32 %v1594, %v1595
        %v1597 = vrot.slane %v1596, 2
        %v1598 = vadd.f32 %v1596, %v1597
        %v1599 = vrot.slane %v1598, 1
        %v1600 = vadd.f32 %v1598, %v1599
        %v1601 = vsel %vm525, %v1578, 0.0
        %v1602 = vsel %vm525, %v1579, 0.0
        %v1603 = vadd.f32 %v1601, %v1602
        %v1604 = vrot.slane %v1603, 4
        %v1605 = vadd.f32 %v1603, %v1604
        %v1606 = vrot.slane %v1605, 2
        %v1607 = vadd.f32 %v1605, %v1606
        %v1608 = vrot.slane %v1607, 1
        %v1609 = vadd.f32 %v1607, %v1608
        %v1610 = vsel %vm525, %v1580, 0.0
        %v1611 = vsel %vm525, %v1581, 0.0
        %v1612 = vadd.f32 %v1610, %v1611
        %v1613 = vrot.slane %v1612, 4
        %v1614 = vadd.f32 %v1612, %v1613
        %v1615 = vrot.slane %v1614, 2
        %v1616 = vadd.f32 %v1614, %v1615
        %v1617 = vrot.slane %v1616, 1
        %v1618 = vadd.f32 %v1616, %v1617
        %v1619 = vsel %vm525, %v1582, 0.0
        %v1620 = vsel %vm525, %v1583, 0.0
        %v1621 = vadd.f32 %v1619, %v1620
        %v1622 = vrot.slane %v1621, 4
        %v1623 = vadd.f32 %v1621, %v1622
        %v1624 = vrot.slane %v1623, 2
        %v1625 = vadd.f32 %v1623, %v1624
        %v1626 = vrot.slane %v1625, 1
        %v1627 = vadd.f32 %v1625, %v1626
        %v1628 = vsel %vm525, %v1584, 0.0
        %v1629 = vsel %vm525, %v1585, 0.0
        %v1630 = vadd.f32 %v1628, %v1629
        %v1631 = vrot.slane %v1630, 4
        %v1632 = vadd.f32 %v1630, %v1631
        %v1633 = vrot.slane %v1632, 2
        %v1634 = vadd.f32 %v1632, %v1633
        %v1635 = vrot.slane %v1634, 1
        %v1636 = vadd.f32 %v1634, %v1635
        %v1637 = vsel %vm525, %v1586, 0.0
        %v1638 = vsel %vm525, %v1587, 0.0
        %v1639 = vadd.f32 %v1637, %v1638
        %v1640 = vrot.slane %v1639, 4
        %v1641 = vadd.f32 %v1639, %v1640
        %v1642 = vrot.slane %v1641, 2
        %v1643 = vadd.f32 %v1641, %v1642
        %v1644 = vrot.slane %v1643, 1
        %v1645 = vadd.f32 %v1643, %v1644
        %v1646 = vsel %vm525, %v1588, 0.0
        %v1647 = vsel %vm525, %v1589, 0.0
        %v1648 = vadd.f32 %v1646, %v1647
        %v1649 = vrot.slane %v1648, 4
        %v1650 = vadd.f32 %v1648, %v1649
        %v1651 = vrot.slane %v1650, 2
        %v1652 = vadd.f32 %v1650, %v1651
        %v1653 = vrot.slane %v1652, 1
        %v1654 = vadd.f32 %v1652, %v1653
        %v1655 = vsel %vm525, %v1590, 0.0
        %v1656 = vsel %vm525, %v1591, 0.0
        %v1657 = vadd.f32 %v1655, %v1656
        %v1658 = vrot.slane %v1657, 4
        %v1659 = vadd.f32 %v1657, %v1658
        %v1660 = vrot.slane %v1659, 2
        %v1661 = vadd.f32 %v1659, %v1660
        %v1662 = vrot.slane %v1661, 1
        %v1663 = vadd.f32 %v1661, %v1662
        %v1672 = vsel %vm661, %v1609, %v1600
        %v1673 = vsel %vm664, %v1618, %v1672
        %v1674 = vsel %vm667, %v1627, %v1673
        %v1675 = vsel %vm670, %v1636, %v1674
        %v1676 = vsel %vm673, %v1645, %v1675
        %v1677 = vsel %vm676, %v1654, %v1676
        %v1678 = vsel %vm679, %v1663, %v1677
        %v1680 = vadd.f32 %v1575, %v1678
        %v1681 = vld [vmem:[%s9] sm:$0xff]
        %v1682 = vld [vmem:[%s9 + $0x8] sm:$0xff]
        %v1683 = vld [vmem:[%s9 + $0x10] sm:$0xff]
        %v1684 = vld [vmem:[%s9 + $0x18] sm:$0xff]
        %v1685 = vld [vmem:[%s10] sm:$0x1]
        %v1687 = vperm.slane %v1685, 0
        %v1690 = vsel %vm525, %v1680, 0
        %1692 = vmatpush.msra.mxu0 0.0
        %1693 = vmatpush.msra.mxu0 0.0
        %1694 = vmatpush.msra.mxu0 0.0
        %1695 = vmatpush.msra.mxu0 0.0
        %1696 = vmatpush.msra.mxu0 0.0
        %1697 = vmatpush.msra.mxu0 0.0
        %1698 = vmatpush.msra.mxu0 0.0
        %1699 = vmatpush.msra.mxu0 0.0
        %1700 = vmatpush.msra.mxu0 0.0
        %1701 = vmatpush.msra.mxu0 0.0
        %1702 = vmatpush.msra.mxu0 0.0
        %1703 = vmatpush.msra.mxu0 0.0
        %1704 = vmatpush.msra.mxu0 %v1684
        %1705 = vmatpush.msra.mxu0 %v1683
        %1706 = vmatpush.msra.mxu0 %v1682
        %1707 = vmatpush.msra.mxu0 %v1681
        %1708 = vmatmul.f32.gmra.mxu0 %v1690
        %v1709 = vpop.f32.mrf.mxu0
        %v1710 = vadd.f32 %v1687, %v1709
        %1711 = vdwg.mxu0
        %vm1712 = vcmask 130048
        %1713 = vst.msk [vmem:[%s507] sm:$0xff] %vm1712, %v1710
        %s1714 = sand.u32 %s318, 1
        %s1715 = scalar_lea.sflag [#allocation4], %s1714
        %s1716 = sand.u32 %s318, 1
        %s1717 = smul.addr %s1716, 8
        %s1718 = scalar_lea.vmem [#allocation10], %s1717
        // Predicated region
        $region89: #{tpu_custom_call.1} parent=71 // pred_check
          %p1719 = pneg %p328
        $region90: #{tpu_custom_call.1} parent=71 // pred_check_branch
          %1721 = sbr.rel (%p1719) target = $region92
        $region91: #{tpu_custom_call.1} parent=71 // pred_region
          %1723 = vsyncadd %s1715, 0
          %s1724 = smul.addr %s32, 8
          %s1725 = scalar_lea.hbm %s13, %s1724
          %s1727 = sshll.u32 %s1718, 4
          %s1728 = int_to_ptr.vmem [resolvable:$true] %s1727
          %s1729 = sshll.u32 %s1725, 4
          %s1730 = int_to_ptr.hbm [resolvable:$true] %s1729
          %1732 = dma.vmem_to_hbm [thread:$0]  %s1728, 128, %s1730, %s1715
        $region92: #{tpu_custom_call.1} parent=71 // pred_fallthru
          _
      $region72: #{tpu_custom_call.1} parent=5 // pred_fallthru
        _
      %p1733 = scmp.le.s32.totalorder 2, %s27
      // Predicated region
      $region93: #{tpu_custom_call.1} parent=5 // pred_check
        %p1734 = pneg %p1733
      $region94: #{tpu_custom_call.1} parent=5 // pred_check_branch
        %1736 = sbr.rel (%p1734) target = $region96
      $region95: #{tpu_custom_call.1} parent=5 // pred_region
        %s1737 = ssub.s32 %s27, 2
        // Predicated region
        $region97: #{tpu_custom_call.1} parent=95 // pred_check
          %p1738 = pneg %p334
        $region98: #{tpu_custom_call.1} parent=95 // pred_check_branch
          %1740 = sbr.rel (%p1738) target = $region100
        $region99: #{tpu_custom_call.1} parent=95 // pred_region
          %s1741 = sand.u32 %s319, 1
          %s1742 = scalar_lea.sflag [#allocation4], %s1741
          %s1743 = sand.u32 %s319, 1
          %s1744 = smul.addr %s1743, 8
          %s1745 = scalar_lea.vmem [#allocation10], %s1744
          %1747 = dma.done %s1742, 128
        $region100: #{tpu_custom_call.1} parent=95 // pred_fallthru
          _
      $region96: #{tpu_custom_call.1} parent=5 // pred_fallthru
        _
    $region6: #{tpu_custom_call.1} parent=1 // loop_footer
      %s31 = sadd.s32 1, %s27
    $region7: #{tpu_custom_call.1} parent=1 // loop_footer_branch
      %26 = sbr.rel target = $region3
    $region8: #{tpu_custom_call.1} parent=1 // loop_exit
      _
    %1748 = vsyncpa [#allocation3], 1
    %s1749 = scalar_lea.sflag [#allocation3], 1
    %1750 = vsyncpa %s1749, 1
    %1751 = vsyncpa [#allocation6], 1
    %1752 = vsyncpa [#allocation9], 1
    %1753 = vsyncpa [#allocation4], 1
    %s1754 = scalar_lea.sflag [#allocation4], 1
    %1755 = vsyncpa %s1754, 1

</llo_original>
